<compile_context>
chip_gen: v7x
topology: tpu7x:2x2x1
jax: 0.10.0
libtpu: 0.0.40
codegen_flags: <defaults>
</compile_context>

<pallas_src>
import functools

import jax
import jax.numpy as jnp
from jax import lax
from jax.experimental import pallas as pl
from jax.experimental.pallas import tpu as pltpu


_VMEM = pl.BlockSpec(memory_space=pltpu.MemorySpace.VMEM)


def _round_up(x, m):
    return (x + m - 1) // m * m


# ----------------------------- Pallas kernels -----------------------------

def _linear_head_kernel(z_ref, w4_ref, b4_ref, w5_ref, b5_ref, o_ref):
    """relu(z @ W4 + b4) @ W5 + b5 -> relu, chained while resident in VMEM."""
    h = jnp.dot(z_ref[...], w4_ref[...], preferred_element_type=jnp.float32)
    h = jnp.maximum(h + b4_ref[...], 0.0)
    h = jnp.dot(h, w5_ref[...], preferred_element_type=jnp.float32)
    o_ref[...] = jnp.maximum(h + b5_ref[...], 0.0)


def _bn_relu_phases(y, g, b, phases, c_out, count, eps):
    """Training-mode BN + ReLU over a phase-separated (M, phases*c_out) matmul result.

    Out-of-range phase entries are exactly zero (no bias was added), so per-channel
    sums stay correct as long as we divide by the true output-pixel count."""
    s1 = jnp.sum(y, axis=0, keepdims=True)
    s2 = jnp.sum(y * y, axis=0, keepdims=True)
    s1c = s1[:, 0:c_out]
    s2c = s2[:, 0:c_out]
    for p in range(1, phases):
        s1c = s1c + s1[:, p * c_out:(p + 1) * c_out]
        s2c = s2c + s2[:, p * c_out:(p + 1) * c_out]
    mean_c = s1c / count
    var_c = jnp.maximum(s2c / count - mean_c * mean_c, 0.0)   # guard cancellation
    inv_c = lax.rsqrt(var_c + eps)
    mean = jnp.concatenate([mean_c] * phases, axis=1)
    inv = jnp.concatenate([inv_c] * phases, axis=1)
    return jnp.maximum((y - mean) * inv * g + b, 0.0)


def _deconv_bn_relu_kernel(col_ref, w_ref, g_ref, b_ref, o_ref, *,
                           phases, c_out, count, eps):
    """Sub-pixel deconv matmul + fused training-mode BatchNorm + ReLU."""
    y = jnp.dot(col_ref[...], w_ref[...], preferred_element_type=jnp.float32)
    o_ref[...] = _bn_relu_phases(y, g_ref[...], b_ref[...], phases, c_out, count, eps)


def _deconv_bn_relu_proj_kernel(col_ref, w_ref, g_ref, b_ref, wp_ref, bp_ref, o_ref, *,
                                phases, c_out, count, eps):
    """Same as above, plus the fused 1x1 'deconv3' (per-phase channel contraction)+bias."""
    y = jnp.dot(col_ref[...], w_ref[...], preferred_element_type=jnp.float32)
    act = _bn_relu_phases(y, g_ref[...], b_ref[...], phases, c_out, count, eps)
    o_ref[...] = (jnp.dot(act, wp_ref[...], preferred_element_type=jnp.float32)
                  + bp_ref[...])


# ------------------------------ JAX glue -----------------------------------

def _pad_hw1(x):
    """(B,H,W,C) -> (B,H+2,W+2,C): one zero ring (sub-pixel deconv boundary)."""
    return jnp.pad(x, ((0, 0), (1, 1), (1, 1), (0, 0)))


def _im2col_2x2(xp):
    """2x2 stride-1 windows of xp (B,Hp,Wp,C) -> (B*(Hp-1)*(Wp-1), 4*C), tap-major K."""
    B, Hp, Wp, C = xp.shape
    Ho, Wo = Hp - 1, Wp - 1
    taps = [xp[:, a:a + Ho, b:b + Wo, :] for a in range(2) for b in range(2)]
    col = jnp.concatenate(taps, axis=-1)
    return col.reshape(B * Ho * Wo, 4 * C), (Ho, Wo)


def _subpixel_weights(w_iohw):
    """ConvTranspose2d(k=3, s=2, p=0) weight (Ci,Co,3,3) -> (4*Ci, 4*Co).

    Rows: the 2x2 im2col taps of the 1-padded, un-dilated input (tap-major, chan-minor).
    Cols: the 4 output phases (dy,dx) in order (0,0),(0,1),(1,0),(1,1), each Co wide."""
    Ci, Co = w_iohw.shape[0], w_iohw.shape[1]
    cols = []
    for dy in range(2):
        for dx in range(2):
            wp = jnp.zeros((4 * Ci, Co), w_iohw.dtype)
            for a in range(2):
                ky = (2 - 2 * a) if dy == 0 else (1 if a == 1 else None)
                if ky is None:
                    continue
                for b in range(2):
                    kx = (2 - 2 * b) if dx == 0 else (1 if b == 1 else None)
                    if kx is None:
                        continue
                    t = a * 2 + b
                    wp = wp.at[t * Ci:(t + 1) * Ci, :].set(w_iohw[:, :, ky, kx])
            cols.append(wp)
    return jnp.concatenate(cols, axis=1)


def _interleave_phases(y, B, Ho, Wo, C, out_h, out_w):
    """(B*Ho*Wo, 4*C) phase-separated -> (B, out_h, out_w, C) interleaved NHWC."""
    y = y.reshape(B, Ho, Wo, 2, 2, C)
    y = y.transpose(0, 1, 3, 2, 4, 5).reshape(B, 2 * Ho, 2 * Wo, C)
    return y[:, :out_h, :out_w, :]


def _pad_rows(a, mult=8):
    m = a.shape[0]
    mp = _round_up(m, mult)
    return a if mp == m else jnp.pad(a, ((0, mp - m), (0, 0)))


# ------------------------------ Decoder ------------------------------------

def init_params(key, latent_dim):
    ks = jax.random.split(key, 10)

    def w(k, shape, scale=0.05):
        return scale * jax.random.normal(k, shape, jnp.float32)

    p = {}
    p['lin4_w'] = w(ks[0], (latent_dim, 128));  p['lin4_b'] = w(ks[1], (128,))
    p['lin5_w'] = w(ks[2], (128, 32 * 6 * 6));  p['lin5_b'] = w(ks[3], (32 * 6 * 6,))
    p['dec1_w'] = w(ks[4], (32, 16, 3, 3));     p['dec1_b'] = w(ks[5], (16,))
    p['bn3_g'] = jnp.ones((16,), jnp.float32);  p['bn3_b'] = jnp.zeros((16,), jnp.float32)
    p['dec2_w'] = w(ks[6], (16, 8, 3, 3));      p['dec2_b'] = w(ks[7], (8,))
    p['bn4_g'] = jnp.ones((8,), jnp.float32);   p['bn4_b'] = jnp.zeros((8,), jnp.float32)
    p['dec3_w'] = w(ks[8], (8, 1, 1, 1));       p['dec3_b'] = w(ks[9], (1,))
    return p


def decoder_forward(p, z, eps=1e-5):
    """z: (B, latent) f32 -> (B, 1, 28, 28) f32, matching Decoder.forward semantics."""
    B, L = z.shape

    # ---- K1: linear4 + ReLU + linear5 + ReLU (one fused call) ---------------
    Bp = _round_up(B, 8)
    Lp = _round_up(L, 128)
    z_p = jnp.zeros((Bp, Lp), jnp.float32).at[:B, :L].set(z)
    w4_p = jnp.zeros((Lp, 128), jnp.float32).at[:L, :].set(p['lin4_w'])
    # permute linear5's output features from torch CHW-flatten order to HWC order
    q = jnp.arange(32 * 6 * 6)
    h_i, rem = q // (6 * 32), q % (6 * 32)
    w_i, c_i = rem // 32, rem % 32
    perm = c_i * 36 + h_i * 6 + w_i
    w5_p = p['lin5_w'][:, perm]
    b5_p = p['lin5_b'][perm].reshape(1, -1)

    h = pl.pallas_call(
        _linear_head_kernel,
        out_shape=jax.ShapeDtypeStruct((Bp, 32 * 6 * 6), jnp.float32),
        in_specs=[_VMEM] * 5,
        out_specs=_VMEM,
    )(z_p, w4_p, p['lin4_b'].reshape(1, -1), w5_p, b5_p)
    x = h[:B].reshape(B, 6, 6, 32)                                   # NHWC (B,6,6,32)

    # ---- K2: deconv1 (32->16, k3, s2) + BN3 + ReLU, sub-pixel decomposition --
    # deconv1 bias is dropped: it cancels exactly under training-mode BatchNorm.
    col1, (H1, W1) = _im2col_2x2(_pad_hw1(x))                        # (B*49, 128)
    m1 = col1.shape[0]
    y1 = pl.pallas_call(
        functools.partial(_deconv_bn_relu_kernel, phases=4, c_out=16,
                          count=float(B * 13 * 13), eps=eps),
        out_shape=jax.ShapeDtypeStruct((_round_up(m1, 8), 64), jnp.float32),
        in_specs=[_VMEM] * 4,
        out_specs=_VMEM,
    )(_pad_rows(col1), _subpixel_weights(p['dec1_w']),
      jnp.tile(p['bn3_g'], 4).reshape(1, -1), jnp.tile(p['bn3_b'], 4).reshape(1, -1))
    x = _interleave_phases(y1[:m1], B, H1, W1, 16, 13, 13)           # (B,13,13,16)

    # ---- K3: deconv2 (16->8, k3, s2, op=1) + BN4 + ReLU + deconv3 (1x1) ------
    col2, (H2, W2) = _im2col_2x2(_pad_hw1(x))                        # (B*196, 64)
    m2 = col2.shape[0]
    w3 = p['dec3_w'].reshape(8)
    wp = jnp.zeros((32, 4), jnp.float32)                             # block-diag 1x1 conv
    for ph in range(4):
        wp = wp.at[ph * 8:(ph + 1) * 8, ph].set(w3)
    bp = jnp.tile(p['dec3_b'].reshape(1, 1), (1, 4))
    y2 = pl.pallas_call(
        functools.partial(_deconv_bn_relu_proj_kernel, phases=4, c_out=8,
                          count=float(B * 28 * 28), eps=eps),
        out_shape=jax.ShapeDtypeStruct((_round_up(m2, 8), 4), jnp.float32),
        in_specs=[_VMEM] * 6,
        out_specs=_VMEM,
    )(_pad_rows(col2), _subpixel_weights(p['dec2_w']),
      jnp.tile(p['bn4_g'], 4).reshape(1, -1), jnp.tile(p['bn4_b'], 4).reshape(1, -1),
      wp, bp)
    img = _interleave_phases(y2[:m2], B, H2, W2, 1, 28, 28)          # (B,28,28,1)
    return jnp.transpose(img, (0, 3, 1, 2))                          # NCHW (B,1,28,28)


# --------------------------- Pure-JAX reference ----------------------------

def reference_decoder(p, z, eps=1e-5):
    """XLA reference using the standard zero-dilation ConvTranspose formulation."""
    B = z.shape[0]
    h = jnp.maximum(z @ p['lin4_w'] + p['lin4_b'], 0.0)
    h = jnp.maximum(h @ p['lin5_w'] + p['lin5_b'], 0.0)
    x = h.reshape(B, 32, 6, 6)

    def deconv(x, w_iohw, b, stride, out_pad):
        k = w_iohw.shape[2]
        w_conv = jnp.transpose(jnp.flip(w_iohw, (2, 3)), (1, 0, 2, 3))   # OIHW
        y = lax.conv_general_dilated(
            x, w_conv, window_strides=(1, 1),
            padding=[(k - 1, k - 1 + out_pad)] * 2,
            lhs_dilation=(stride, stride),
            dimension_numbers=('NCHW', 'OIHW', 'NCHW'))
        return y + b.reshape(1, -1, 1, 1)

    def bn_relu(x, g, b):
        mean = jnp.mean(x, axis=(0, 2, 3), keepdims=True)
        var = jnp.mean((x - mean) ** 2, axis=(0, 2, 3), keepdims=True)
        y = (x - mean) * lax.rsqrt(var + eps) * g.reshape(1, -1, 1, 1) \
            + b.reshape(1, -1, 1, 1)
        return jnp.maximum(y, 0.0)

    x = deconv(x, p['dec1_w'], p['dec1_b'], 2, 0)
    x = bn_relu(x, p['bn3_g'], p['bn3_b'])
    x = deconv(x, p['dec2_w'], p['dec2_b'], 2, 1)
    x = bn_relu(x, p['bn4_g'], p['bn4_b'])
    x = deconv(x, p['dec3_w'], p['dec3_b'], 1, 0)
    return x


if __name__ == "__main__":
    latent_dim = 8
    B = 2
    key = jax.random.PRNGKey(0)
    k_param, k_z = jax.random.split(key, 2)

    params = init_params(k_param, latent_dim)
    z = jax.random.normal(k_z, (B, latent_dim), jnp.float32)

    out = jax.jit(decoder_forward)(params, z)
    jax.block_until_ready(out)
    assert out.shape == (B, 1, 28, 28)

    ref = jax.jit(reference_decoder)(params, z)
    max_err = float(jnp.max(jnp.abs(out - ref)))
    assert max_err < 5e-3, f"mismatch vs pure-JAX reference: max_err={max_err}"

    print("KERNEL_OK")
</pallas_src>

<mosaic_0001>
module attributes {stable_mosaic.version = 11 : i64} {
  func.func private @main(%arg0: i32) attributes {dimension_semantics = [#tpu.dimension_semantics<core_parallel>], iteration_bounds = array<i64: 2>, tpu.core_type = #tpu.core_type<sc_scalar_subcore>, window_params = []} {
    return
  }
}

module attributes {stable_mosaic.version = 11 : i64} {
  func.func private @main(%arg0: i32) attributes {dimension_semantics = [#tpu.dimension_semantics<core_parallel>], iteration_bounds = array<i64: 2>, tpu.core_type = #tpu.core_type<sc_scalar_subcore>, window_params = []} {
    return
  }
}

module attributes {stable_mosaic.version = 11 : i64} {
  func.func @_linear_head_kernel(%arg0: memref<8x128xf32, #tpu.memory_space<vmem>>, %arg1: memref<128x128xf32, #tpu.memory_space<vmem>>, %arg2: memref<1x128xf32, #tpu.memory_space<vmem>>, %arg3: memref<128x1152xf32, #tpu.memory_space<vmem>>, %arg4: memref<1x1152xf32, #tpu.memory_space<vmem>>, %arg5: memref<8x1152xf32, #tpu.memory_space<vmem>>) attributes {dimension_semantics = [], scalar_prefetch = 0 : i64, scratch_operands = 0 : i64, tpu.core_type = #tpu.core_type<tc>} {
    %c0 = arith.constant 0 : index
    %c0_0 = arith.constant 0 : index
    %0 = vector.load %arg0[%c0, %c0_0] : memref<8x128xf32, #tpu.memory_space<vmem>>, vector<8x128xf32>
    %c0_1 = arith.constant 0 : index
    %c0_2 = arith.constant 0 : index
    %1 = vector.load %arg1[%c0_1, %c0_2] : memref<128x128xf32, #tpu.memory_space<vmem>>, vector<128x128xf32>
    %cst = arith.constant dense<0.000000e+00> : vector<8x128xf32>
    %2 = tpu.matmul %0, %1, %cst {dimension_numbers = #tpu.dot_dimension_numbers<[1], [0], [0], [1], [0, 0, 1, 1], [], []>} : vector<8x128xf32>, vector<128x128xf32>, vector<8x128xf32> -> vector<8x128xf32>
    %c0_3 = arith.constant 0 : index
    %c0_4 = arith.constant 0 : index
    %3 = vector.load %arg2[%c0_3, %c0_4] : memref<1x128xf32, #tpu.memory_space<vmem>>, vector<1x128xf32>
    %4 = vector.broadcast %3 : vector<1x128xf32> to vector<8x128xf32>
    %5 = arith.addf %2, %4 : vector<8x128xf32>
    %cst_5 = arith.constant 0.000000e+00 : f32
    %6 = vector.broadcast %cst_5 : f32 to vector<8x128xf32>
    %7 = arith.maximumf %5, %6 : vector<8x128xf32>
    %c0_6 = arith.constant 0 : index
    %c0_7 = arith.constant 0 : index
    %8 = vector.load %arg3[%c0_6, %c0_7] : memref<128x1152xf32, #tpu.memory_space<vmem>>, vector<128x1152xf32>
    %cst_8 = arith.constant dense<0.000000e+00> : vector<8x1152xf32>
    %9 = tpu.matmul %7, %8, %cst_8 {dimension_numbers = #tpu.dot_dimension_numbers<[1], [0], [0], [1], [0, 0, 1, 1], [], []>} : vector<8x128xf32>, vector<128x1152xf32>, vector<8x1152xf32> -> vector<8x1152xf32>
    %c0_9 = arith.constant 0 : index
    %c0_10 = arith.constant 0 : index
    %10 = vector.load %arg4[%c0_9, %c0_10] : memref<1x1152xf32, #tpu.memory_space<vmem>>, vector<1x1152xf32>
    %11 = vector.broadcast %10 : vector<1x1152xf32> to vector<8x1152xf32>
    %12 = arith.addf %9, %11 : vector<8x1152xf32>
    %cst_11 = arith.constant 0.000000e+00 : f32
    %13 = vector.broadcast %cst_11 : f32 to vector<8x1152xf32>
    %14 = arith.maximumf %12, %13 : vector<8x1152xf32>
    %c0_12 = arith.constant 0 : index
    %c0_13 = arith.constant 0 : index
    %15 = vector.load %arg5[%c0_12, %c0_13] : memref<8x1152xf32, #tpu.memory_space<vmem>>, vector<8x1152xf32>
    tpu.vector_store %arg5[%c0_12, %c0_13], %14 {strides = array<i32>} : memref<8x1152xf32, #tpu.memory_space<vmem>>, vector<8x1152xf32>,
    return
  }
}

module attributes {stable_mosaic.version = 11 : i64} {
  func.func @_deconv_bn_relu_kernel(%arg0: memref<104x128xf32, #tpu.memory_space<vmem>>, %arg1: memref<128x64xf32, #tpu.memory_space<vmem>>, %arg2: memref<1x64xf32, #tpu.memory_space<vmem>>, %arg3: memref<1x64xf32, #tpu.memory_space<vmem>>, %arg4: memref<104x64xf32, #tpu.memory_space<vmem>>) attributes {dimension_semantics = [], scalar_prefetch = 0 : i64, scratch_operands = 0 : i64, tpu.core_type = #tpu.core_type<tc>} {
    %c0 = arith.constant 0 : index
    %c0_0 = arith.constant 0 : index
    %0 = vector.load %arg0[%c0, %c0_0] : memref<104x128xf32, #tpu.memory_space<vmem>>, vector<104x128xf32>
    %c0_1 = arith.constant 0 : index
    %c0_2 = arith.constant 0 : index
    %1 = vector.load %arg1[%c0_1, %c0_2] : memref<128x64xf32, #tpu.memory_space<vmem>>, vector<128x64xf32>
    %cst = arith.constant dense<0.000000e+00> : vector<104x64xf32>
    %2 = tpu.matmul %0, %1, %cst {dimension_numbers = #tpu.dot_dimension_numbers<[1], [0], [0], [1], [0, 0, 1, 1], [], []>} : vector<104x128xf32>, vector<128x64xf32>, vector<104x64xf32> -> vector<104x64xf32>
    %c0_3 = arith.constant 0 : index
    %c0_4 = arith.constant 0 : index
    %3 = vector.load %arg2[%c0_3, %c0_4] : memref<1x64xf32, #tpu.memory_space<vmem>>, vector<1x64xf32>
    %c0_5 = arith.constant 0 : index
    %c0_6 = arith.constant 0 : index
    %4 = vector.load %arg3[%c0_5, %c0_6] : memref<1x64xf32, #tpu.memory_space<vmem>>, vector<1x64xf32>
    %cst_7 = arith.constant dense<0.000000e+00> : vector<64xf32>
    %5 = vector.multi_reduction <add>, %2, %cst_7 [0] : vector<104x64xf32> to vector<64xf32>
    %6 = vector.shape_cast %5 : vector<64xf32> to vector<1x64xf32>
    %7 = arith.mulf %2, %2 : vector<104x64xf32>
    %cst_8 = arith.constant dense<0.000000e+00> : vector<64xf32>
    %8 = vector.multi_reduction <add>, %7, %cst_8 [0] : vector<104x64xf32> to vector<64xf32>
    %9 = vector.shape_cast %8 : vector<64xf32> to vector<1x64xf32>
    %10 = vector.extract_strided_slice %6 {offsets = [0, 0], sizes = [1, 16], strides = [1, 1]} : vector<1x64xf32> to vector<1x16xf32>
    %11 = vector.extract_strided_slice %9 {offsets = [0, 0], sizes = [1, 16], strides = [1, 1]} : vector<1x64xf32> to vector<1x16xf32>
    %12 = vector.extract_strided_slice %6 {offsets = [0, 16], sizes = [1, 16], strides = [1, 1]} : vector<1x64xf32> to vector<1x16xf32>
    %13 = arith.addf %10, %12 : vector<1x16xf32>
    %14 = vector.extract_strided_slice %9 {offsets = [0, 16], sizes = [1, 16], strides = [1, 1]} : vector<1x64xf32> to vector<1x16xf32>
    %15 = arith.addf %11, %14 : vector<1x16xf32>
    %16 = vector.extract_strided_slice %6 {offsets = [0, 32], sizes = [1, 16], strides = [1, 1]} : vector<1x64xf32> to vector<1x16xf32>
    %17 = arith.addf %13, %16 : vector<1x16xf32>
    %18 = vector.extract_strided_slice %9 {offsets = [0, 32], sizes = [1, 16], strides = [1, 1]} : vector<1x64xf32> to vector<1x16xf32>
    %19 = arith.addf %15, %18 : vector<1x16xf32>
    %20 = vector.extract_strided_slice %6 {offsets = [0, 48], sizes = [1, 16], strides = [1, 1]} : vector<1x64xf32> to vector<1x16xf32>
    %21 = arith.addf %17, %20 : vector<1x16xf32>
    %22 = vector.extract_strided_slice %9 {offsets = [0, 48], sizes = [1, 16], strides = [1, 1]} : vector<1x64xf32> to vector<1x16xf32>
    %23 = arith.addf %19, %22 : vector<1x16xf32>
    %cst_9 = arith.constant 3.380000e+02 : f32
    %24 = vector.broadcast %cst_9 : f32 to vector<1x16xf32>
    %25 = arith.divf %21, %24 : vector<1x16xf32>
    %cst_10 = arith.constant 3.380000e+02 : f32
    %26 = vector.broadcast %cst_10 : f32 to vector<1x16xf32>
    %27 = arith.divf %23, %26 : vector<1x16xf32>
    %28 = arith.mulf %25, %25 : vector<1x16xf32>
    %29 = arith.subf %27, %28 : vector<1x16xf32>
    %cst_11 = arith.constant 0.000000e+00 : f32
    %30 = vector.broadcast %cst_11 : f32 to vector<1x16xf32>
    %31 = arith.maximumf %29, %30 : vector<1x16xf32>
    %cst_12 = arith.constant 9.99999974E-6 : f32
    %32 = vector.broadcast %cst_12 : f32 to vector<1x16xf32>
    %33 = arith.addf %31, %32 : vector<1x16xf32>
    %34 = math.rsqrt %33 : vector<1x16xf32>
    %35 = tpu.concatenate %25, %25, %25, %25 in 1 : vector<1x16xf32>, vector<1x16xf32>, vector<1x16xf32>, vector<1x16xf32> -> vector<1x64xf32>
    %36 = tpu.concatenate %34, %34, %34, %34 in 1 : vector<1x16xf32>, vector<1x16xf32>, vector<1x16xf32>, vector<1x16xf32> -> vector<1x64xf32>
    %37 = vector.broadcast %35 : vector<1x64xf32> to vector<104x64xf32>
    %38 = arith.subf %2, %37 : vector<104x64xf32>
    %39 = vector.broadcast %36 : vector<1x64xf32> to vector<104x64xf32>
    %40 = arith.mulf %38, %39 : vector<104x64xf32>
    %41 = vector.broadcast %3 : vector<1x64xf32> to vector<104x64xf32>
    %42 = arith.mulf %40, %41 : vector<104x64xf32>
    %43 = vector.broadcast %4 : vector<1x64xf32> to vector<104x64xf32>
    %44 = arith.addf %42, %43 : vector<104x64xf32>
    %cst_13 = arith.constant 0.000000e+00 : f32
    %45 = vector.broadcast %cst_13 : f32 to vector<104x64xf32>
    %46 = arith.maximumf %44, %45 : vector<104x64xf32>
    %c0_14 = arith.constant 0 : index
    %c0_15 = arith.constant 0 : index
    %47 = vector.load %arg4[%c0_14, %c0_15] : memref<104x64xf32, #tpu.memory_space<vmem>>, vector<104x64xf32>
    tpu.vector_store %arg4[%c0_14, %c0_15], %46 {strides = array<i32>} : memref<104x64xf32, #tpu.memory_space<vmem>>, vector<104x64xf32>,
    return
  }
}

module attributes {stable_mosaic.version = 11 : i64} {
  func.func @_deconv_bn_relu_proj_kernel(%arg0: memref<392x64xf32, #tpu.memory_space<vmem>>, %arg1: memref<64x32xf32, #tpu.memory_space<vmem>>, %arg2: memref<1x32xf32, #tpu.memory_space<vmem>>, %arg3: memref<1x32xf32, #tpu.memory_space<vmem>>, %arg4: memref<32x4xf32, #tpu.memory_space<vmem>>, %arg5: memref<1x4xf32, #tpu.memory_space<vmem>>, %arg6: memref<392x4xf32, #tpu.memory_space<vmem>>) attributes {dimension_semantics = [], scalar_prefetch = 0 : i64, scratch_operands = 0 : i64, tpu.core_type = #tpu.core_type<tc>} {
    %c0 = arith.constant 0 : index
    %c0_0 = arith.constant 0 : index
    %0 = vector.load %arg0[%c0, %c0_0] : memref<392x64xf32, #tpu.memory_space<vmem>>, vector<392x64xf32>
    %c0_1 = arith.constant 0 : index
    %c0_2 = arith.constant 0 : index
    %1 = vector.load %arg1[%c0_1, %c0_2] : memref<64x32xf32, #tpu.memory_space<vmem>>, vector<64x32xf32>
    %cst = arith.constant dense<0.000000e+00> : vector<392x32xf32>
    %2 = tpu.matmul %0, %1, %cst {dimension_numbers = #tpu.dot_dimension_numbers<[1], [0], [0], [1], [0, 0, 1, 1], [], []>} : vector<392x64xf32>, vector<64x32xf32>, vector<392x32xf32> -> vector<392x32xf32>
    %c0_3 = arith.constant 0 : index
    %c0_4 = arith.constant 0 : index
    %3 = vector.load %arg2[%c0_3, %c0_4] : memref<1x32xf32, #tpu.memory_space<vmem>>, vector<1x32xf32>
    %c0_5 = arith.constant 0 : index
    %c0_6 = arith.constant 0 : index
    %4 = vector.load %arg3[%c0_5, %c0_6] : memref<1x32xf32, #tpu.memory_space<vmem>>, vector<1x32xf32>
    %cst_7 = arith.constant dense<0.000000e+00> : vector<32xf32>
    %5 = vector.multi_reduction <add>, %2, %cst_7 [0] : vector<392x32xf32> to vector<32xf32>
    %6 = vector.shape_cast %5 : vector<32xf32> to vector<1x32xf32>
    %7 = arith.mulf %2, %2 : vector<392x32xf32>
    %cst_8 = arith.constant dense<0.000000e+00> : vector<32xf32>
    %8 = vector.multi_reduction <add>, %7, %cst_8 [0] : vector<392x32xf32> to vector<32xf32>
    %9 = vector.shape_cast %8 : vector<32xf32> to vector<1x32xf32>
    %10 = vector.extract_strided_slice %6 {offsets = [0, 0], sizes = [1, 8], strides = [1, 1]} : vector<1x32xf32> to vector<1x8xf32>
    %11 = vector.extract_strided_slice %9 {offsets = [0, 0], sizes = [1, 8], strides = [1, 1]} : vector<1x32xf32> to vector<1x8xf32>
    %12 = vector.extract_strided_slice %6 {offsets = [0, 8], sizes = [1, 8], strides = [1, 1]} : vector<1x32xf32> to vector<1x8xf32>
    %13 = arith.addf %10, %12 : vector<1x8xf32>
    %14 = vector.extract_strided_slice %9 {offsets = [0, 8], sizes = [1, 8], strides = [1, 1]} : vector<1x32xf32> to vector<1x8xf32>
    %15 = arith.addf %11, %14 : vector<1x8xf32>
    %16 = vector.extract_strided_slice %6 {offsets = [0, 16], sizes = [1, 8], strides = [1, 1]} : vector<1x32xf32> to vector<1x8xf32>
    %17 = arith.addf %13, %16 : vector<1x8xf32>
    %18 = vector.extract_strided_slice %9 {offsets = [0, 16], sizes = [1, 8], strides = [1, 1]} : vector<1x32xf32> to vector<1x8xf32>
    %19 = arith.addf %15, %18 : vector<1x8xf32>
    %20 = vector.extract_strided_slice %6 {offsets = [0, 24], sizes = [1, 8], strides = [1, 1]} : vector<1x32xf32> to vector<1x8xf32>
    %21 = arith.addf %17, %20 : vector<1x8xf32>
    %22 = vector.extract_strided_slice %9 {offsets = [0, 24], sizes = [1, 8], strides = [1, 1]} : vector<1x32xf32> to vector<1x8xf32>
    %23 = arith.addf %19, %22 : vector<1x8xf32>
    %cst_9 = arith.constant 1.568000e+03 : f32
    %24 = vector.broadcast %cst_9 : f32 to vector<1x8xf32>
    %25 = arith.divf %21, %24 : vector<1x8xf32>
    %cst_10 = arith.constant 1.568000e+03 : f32
    %26 = vector.broadcast %cst_10 : f32 to vector<1x8xf32>
    %27 = arith.divf %23, %26 : vector<1x8xf32>
    %28 = arith.mulf %25, %25 : vector<1x8xf32>
    %29 = arith.subf %27, %28 : vector<1x8xf32>
    %cst_11 = arith.constant 0.000000e+00 : f32
    %30 = vector.broadcast %cst_11 : f32 to vector<1x8xf32>
    %31 = arith.maximumf %29, %30 : vector<1x8xf32>
    %cst_12 = arith.constant 9.99999974E-6 : f32
    %32 = vector.broadcast %cst_12 : f32 to vector<1x8xf32>
    %33 = arith.addf %31, %32 : vector<1x8xf32>
    %34 = math.rsqrt %33 : vector<1x8xf32>
    %35 = tpu.concatenate %25, %25, %25, %25 in 1 : vector<1x8xf32>, vector<1x8xf32>, vector<1x8xf32>, vector<1x8xf32> -> vector<1x32xf32>
    %36 = tpu.concatenate %34, %34, %34, %34 in 1 : vector<1x8xf32>, vector<1x8xf32>, vector<1x8xf32>, vector<1x8xf32> -> vector<1x32xf32>
    %37 = vector.broadcast %35 : vector<1x32xf32> to vector<392x32xf32>
    %38 = arith.subf %2, %37 : vector<392x32xf32>
    %39 = vector.broadcast %36 : vector<1x32xf32> to vector<392x32xf32>
    %40 = arith.mulf %38, %39 : vector<392x32xf32>
    %41 = vector.broadcast %3 : vector<1x32xf32> to vector<392x32xf32>
    %42 = arith.mulf %40, %41 : vector<392x32xf32>
    %43 = vector.broadcast %4 : vector<1x32xf32> to vector<392x32xf32>
    %44 = arith.addf %42, %43 : vector<392x32xf32>
    %cst_13 = arith.constant 0.000000e+00 : f32
    %45 = vector.broadcast %cst_13 : f32 to vector<392x32xf32>
    %46 = arith.maximumf %44, %45 : vector<392x32xf32>
    %c0_14 = arith.constant 0 : index
    %c0_15 = arith.constant 0 : index
    %47 = vector.load %arg4[%c0_14, %c0_15] : memref<32x4xf32, #tpu.memory_space<vmem>>, vector<32x4xf32>
    %cst_16 = arith.constant dense<0.000000e+00> : vector<392x4xf32>
    %48 = tpu.matmul %46, %47, %cst_16 {dimension_numbers = #tpu.dot_dimension_numbers<[1], [0], [0], [1], [0, 0, 1, 1], [], []>} : vector<392x32xf32>, vector<32x4xf32>, vector<392x4xf32> -> vector<392x4xf32>
    %c0_17 = arith.constant 0 : index
    %c0_18 = arith.constant 0 : index
    %49 = vector.load %arg5[%c0_17, %c0_18] : memref<1x4xf32, #tpu.memory_space<vmem>>, vector<1x4xf32>
    %50 = vector.broadcast %49 : vector<1x4xf32> to vector<392x4xf32>
    %51 = arith.addf %48, %50 : vector<392x4xf32>
    %c0_19 = arith.constant 0 : index
    %c0_20 = arith.constant 0 : index
    %52 = vector.load %arg6[%c0_19, %c0_20] : memref<392x4xf32, #tpu.memory_space<vmem>>, vector<392x4xf32>
    tpu.vector_store %arg6[%c0_19, %c0_20], %51 {strides = array<i32>} : memref<392x4xf32, #tpu.memory_space<vmem>>, vector<392x4xf32>,
    return
  }
}

</mosaic_0001>

<llo_original>
// kernel: tile.27
$region0: #{tile.27}
  #allocation0 [shape = 's32[1]{0}', space=sflag, size = 0x4, scoped, tag = 'scoped memory for tile.27']
  %s0 = inlined_call_operand.vmem [shape: f32[16], index: 0, kind: input, shape index: {}]
  %s1 = inlined_call_operand.vmem [shape: f32[4,16], index: 1, kind: output, shape index: {}]
  // Predicated region
  $region2: #{tile.27} parent=0 // pred_check
    _
  $region3: #{tile.27} parent=0 // pred_check_branch
    %3 = sbr.rel (0) target = $region5
  $region4: #{tile.27} parent=0 // pred_region
    _
  $region5: #{tile.27} parent=0 // pred_fallthru
    _
  %v4 = vld [vmem:[%s0] ss:$0 sm:$0xff]
  %5 = vst [vmem:[%s1] sm:$0xf] %v4

// kernel: tile.28
$region0: #{tile.28}
  %s0 = inlined_call_operand.vmem [shape: f32[4,16], index: 0, kind: input, shape index: {}]
  %s1 = inlined_call_operand.vmem [shape: f32[1,64], index: 1, kind: output, shape index: {}]
  $region1: #{tile.28} parent=0
    #allocation0 [shape = 'u8[4096]{0}', space=vmem, size = 0x1000, scoped, tag = 'scoped mem for output reshape']
    #allocation1 [shape = 'u8[4096]{0}', space=vmem, size = 0x1000, scoped, tag = 'scoped mem for input reshape']
    %s3 = sshllo.u32 0, 4
    %v4 = vld [vmem:[%s0] sm:%s3]
    %5 = vst [vmem:[#allocation1] sm:%s3] %v4
    %v6 = vld [vmem:[#allocation1] sm:$0x1]
    %vm7 = vcmask 130048
    %8 = vst.msk [vmem:[#allocation0] sm:$0x1] %vm7, %v6
    %s9 = scalar_lea.vmem [#allocation1], 3
    %v10 = vld [vmem:[%s9] sm:$0x1]
    %11 = vrot.lane.b32.xlu0 %v10, 48
    %v12 = vpop.permute.xlu0 %11
    %vm13 = vcmask 523648
    %14 = vst.msk [vmem:[#allocation0] sm:$0x1] %vm13, %v12
    %s15 = scalar_lea.vmem [#allocation1], 2
    %v16 = vld [vmem:[%s15] sm:$0x1]
    %17 = vrot.lane.b32.xlu0 %v16, 32
    %v18 = vpop.permute.xlu0 %17
    %vm19 = vcmask 392448
    %20 = vst.msk [vmem:[#allocation0] sm:$0x1] %vm19, %v18
    %s21 = scalar_lea.vmem [#allocation1], 1
    %v22 = vld [vmem:[%s21] sm:$0x1]
    %23 = vrot.lane.b32.xlu0 %v22, 16
    %v24 = vpop.permute.xlu0 %23
    %vm25 = vcmask 261248
    %26 = vst.msk [vmem:[#allocation0] sm:$0x1] %vm25, %v24
    %s28 = sshllo.u32 0, 1
    %v30 = vld [vmem:[#allocation0] sm:%s28]
    %s31 = sshllo.u32 0, 1
    %32 = vst [vmem:[%s1] sm:%s31] %v30

// kernel: tile.41
$region0: #{tile.41}
  #allocation0 [shape = 's32[1]{0}', space=sflag, size = 0x4, scoped, tag = 'scoped memory for tile.41']
  %s0 = inlined_call_operand.vmem [shape: f32[8], index: 0, kind: input, shape index: {}]
  %s1 = inlined_call_operand.vmem [shape: f32[4,8], index: 1, kind: output, shape index: {}]
  // Predicated region
  $region2: #{tile.41} parent=0 // pred_check
    _
  $region3: #{tile.41} parent=0 // pred_check_branch
    %3 = sbr.rel (0) target = $region5
  $region4: #{tile.41} parent=0 // pred_region
    _
  $region5: #{tile.41} parent=0 // pred_fallthru
    _
  %v4 = vld [vmem:[%s0] ss:$0 sm:$0xff]
  %5 = vst [vmem:[%s1] sm:$0xf] %v4

// kernel: tile.42
$region0: #{tile.42}
  %s0 = inlined_call_operand.vmem [shape: f32[4,8], index: 0, kind: input, shape index: {}]
  %s1 = inlined_call_operand.vmem [shape: f32[1,32], index: 1, kind: output, shape index: {}]
  $region1: #{tile.42} parent=0
    #allocation0 [shape = 'u8[4096]{0}', space=vmem, size = 0x1000, scoped, tag = 'scoped mem for output reshape']
    #allocation1 [shape = 'u8[4096]{0}', space=vmem, size = 0x1000, scoped, tag = 'scoped mem for input reshape']
    %s3 = sshllo.u32 0, 4
    %v4 = vld [vmem:[%s0] sm:%s3]
    %5 = vst [vmem:[#allocation1] sm:%s3] %v4
    %v6 = vld [vmem:[#allocation1] sm:$0x1]
    %vm7 = vcmask 64512
    %8 = vst.msk [vmem:[#allocation0] sm:$0x1] %vm7, %v6
    %s9 = scalar_lea.vmem [#allocation1], 3
    %v10 = vld [vmem:[%s9] sm:$0x1]
    %11 = vrot.lane.b32.xlu0 %v10, 24
    %v12 = vpop.permute.xlu0 %11
    %vm13 = vcmask 261312
    %14 = vst.msk [vmem:[#allocation0] sm:$0x1] %vm13, %v12
    %s15 = scalar_lea.vmem [#allocation1], 2
    %v16 = vld [vmem:[%s15] sm:$0x1]
    %17 = vrot.lane.b32.xlu0 %v16, 16
    %v18 = vpop.permute.xlu0 %17
    %vm19 = vcmask 195712
    %20 = vst.msk [vmem:[#allocation0] sm:$0x1] %vm19, %v18
    %s21 = scalar_lea.vmem [#allocation1], 1
    %v22 = vld [vmem:[%s21] sm:$0x1]
    %23 = vrot.lane.b32.xlu0 %v22, 8
    %v24 = vpop.permute.xlu0 %23
    %vm25 = vcmask 130112
    %26 = vst.msk [vmem:[#allocation0] sm:$0x1] %vm25, %v24
    %s28 = sshllo.u32 0, 1
    %v30 = vld [vmem:[#allocation0] sm:%s28]
    %s31 = sshllo.u32 0, 1
    %32 = vst [vmem:[%s1] sm:%s31] %v30

// kernel: decoder_forward.3
$region0: #{decoder_forward.3}
  #allocation0 [shape = 'u32[]', space=smem, size = 0x4, offset = 0x4, fixed_abs, tag = 'smem constant byte address 0x4 - core index']
  #allocation1 [shape = 'u32[144,128]{1,0:T(1,128)}', space=vmem, size = 0x12000, scoped, tag = 'internal scratch']
  %s0 = inlined_call_operand.vmem [shape: f32[8,128], index: 0, kind: input, shape index: {}]
  %s1 = inlined_call_operand.vmem [shape: f32[128,128], index: 1, kind: input, shape index: {}]
  %s2 = inlined_call_operand.vmem [shape: f32[1,128], index: 2, kind: input, shape index: {}]
  %s3 = inlined_call_operand.vmem [shape: f32[128,1152], index: 3, kind: input, shape index: {}]
  %s4 = inlined_call_operand.vmem [shape: f32[1,1152], index: 4, kind: input, shape index: {}]
  %s5 = inlined_call_operand.vmem [shape: f32[8,1152], index: 5, kind: output, shape index: {}]
  %s6 = sld [smem:[#allocation0]]
  $region30: #{decoder_forward.3} parent=0
    _
  %s8 = ssub.s32 1, %s6
  %s9 = scalar_select 0, %s8, %s6
  // Predicated region
  $region2: #{decoder_forward.3} parent=0 // pred_check
    _
  $region3: #{decoder_forward.3} parent=0 // pred_check_branch
    %11 = sbr.rel (0) target = $region5
  $region4: #{decoder_forward.3} parent=0 // pred_region
    _
  $region5: #{decoder_forward.3} parent=0 // pred_fallthru
    _
  // Predicated region
  $region6: #{decoder_forward.3} parent=0 // pred_check
    _
  $region7: #{decoder_forward.3} parent=0 // pred_check_branch
    %13 = sbr.rel (0) target = $region9
  $region8: #{decoder_forward.3} parent=0 // pred_region
    _
  $region9: #{decoder_forward.3} parent=0 // pred_fallthru
    _
  // Predicated region
  $region10: #{decoder_forward.3} parent=0 // pred_check
    _
  $region11: #{decoder_forward.3} parent=0 // pred_check_branch
    %15 = sbr.rel (0) target = $region13
  $region12: #{decoder_forward.3} parent=0 // pred_region
    _
  $region13: #{decoder_forward.3} parent=0 // pred_fallthru
    _
  // Predicated region
  $region14: #{decoder_forward.3} parent=0 // pred_check
    _
  $region15: #{decoder_forward.3} parent=0 // pred_check_branch
    %17 = sbr.rel (0) target = $region17
  $region16: #{decoder_forward.3} parent=0 // pred_region
    _
  $region17: #{decoder_forward.3} parent=0 // pred_fallthru
    _
  // Predicated region
  $region18: #{decoder_forward.3} parent=0 // pred_check
    _
  $region19: #{decoder_forward.3} parent=0 // pred_check_branch
    %19 = sbr.rel (0) target = $region21
  $region20: #{decoder_forward.3} parent=0 // pred_region
    _
  $region21: #{decoder_forward.3} parent=0 // pred_fallthru
    _
  %v20 = vld [vmem:[%s0] sm:$0xff]
  %v21 = vld [vmem:[%s1] sm:$0xff]
  %v22 = vld [vmem:[%s1 + $0x8] sm:$0xff]
  %v23 = vld [vmem:[%s1 + $0x10] sm:$0xff]
  %v24 = vld [vmem:[%s1 + $0x18] sm:$0xff]
  %v25 = vld [vmem:[%s1 + $0x20] sm:$0xff]
  %v26 = vld [vmem:[%s1 + $0x28] sm:$0xff]
  %v27 = vld [vmem:[%s1 + $0x30] sm:$0xff]
  %v28 = vld [vmem:[%s1 + $0x38] sm:$0xff]
  %v29 = vld [vmem:[%s1 + $0x40] sm:$0xff]
  %v30 = vld [vmem:[%s1 + $0x48] sm:$0xff]
  %v31 = vld [vmem:[%s1 + $0x50] sm:$0xff]
  %v32 = vld [vmem:[%s1 + $0x58] sm:$0xff]
  %v33 = vld [vmem:[%s1 + $0x60] sm:$0xff]
  %v34 = vld [vmem:[%s1 + $0x68] sm:$0xff]
  %v35 = vld [vmem:[%s1 + $0x70] sm:$0xff]
  %v36 = vld [vmem:[%s1 + $0x78] sm:$0xff]
  %v37 = vld [vmem:[%s2] sm:$0x1]
  %v39 = vlaneseq
  %v40 = vshrl.u32 %v39, 7
  %v41 = vsub.s32 0, %v40
  %v42 = vrot.slane %v37, %v41
  %44 = vmatprep.subr.mxu0 0.0
  %45 = vmatpush1.msra.mxu0 %v21
  %46 = vmatprep.subr.mxu0 0.0
  %47 = vmatpush1.msra.mxu0 %v22
  %48 = vmatprep.subr.mxu0 0.0
  %49 = vmatpush1.msra.mxu0 %v23
  %50 = vmatprep.subr.mxu0 0.0
  %51 = vmatpush1.msra.mxu0 %v24
  %52 = vmatprep.subr.mxu0 0.0
  %53 = vmatpush1.msra.mxu0 %v25
  %54 = vmatprep.subr.mxu0 0.0
  %55 = vmatpush1.msra.mxu0 %v26
  %56 = vmatprep.subr.mxu0 0.0
  %57 = vmatpush1.msra.mxu0 %v27
  %58 = vmatprep.subr.mxu0 0.0
  %59 = vmatpush1.msra.mxu0 %v28
  %60 = vmatprep.subr.mxu0 0.0
  %61 = vmatpush1.msra.mxu0 %v29
  %62 = vmatprep.subr.mxu0 0.0
  %63 = vmatpush1.msra.mxu0 %v30
  %64 = vmatprep.subr.mxu0 0.0
  %65 = vmatpush1.msra.mxu0 %v31
  %66 = vmatprep.subr.mxu0 0.0
  %67 = vmatpush1.msra.mxu0 %v32
  %68 = vmatprep.subr.mxu0 0.0
  %69 = vmatpush1.msra.mxu0 %v33
  %70 = vmatprep.subr.mxu0 0.0
  %71 = vmatpush1.msra.mxu0 %v34
  %72 = vmatprep.subr.mxu0 0.0
  %73 = vmatpush1.msra.mxu0 %v35
  %74 = vmatprep.subr.mxu0 0.0
  %75 = vmatpush1.msra.mxu0 %v36
  %76 = vmatprep.subr.mxu0 0.0
  %77 = vmatpush1.msra.mxu0 0.0
  %78 = vmatprep.subr.mxu0 0.0
  %79 = vmatpush1.msra.mxu0 0.0
  %80 = vmatprep.subr.mxu0 0.0
  %81 = vmatpush1.msra.mxu0 0.0
  %82 = vmatprep.subr.mxu0 0.0
  %83 = vmatpush1.msra.mxu0 0.0
  %84 = vmatprep.subr.mxu0 0.0
  %85 = vmatpush1.msra.mxu0 0.0
  %86 = vmatprep.subr.mxu0 0.0
  %87 = vmatpush1.msra.mxu0 0.0
  %88 = vmatprep.subr.mxu0 0.0
  %89 = vmatpush1.msra.mxu0 0.0
  %90 = vmatprep.subr.mxu0 0.0
  %91 = vmatpush1.msra.mxu0 0.0
  %92 = vmatprep.subr.mxu0 0.0
  %93 = vmatpush1.msra.mxu0 0.0
  %94 = vmatprep.subr.mxu0 0.0
  %95 = vmatpush1.msra.mxu0 0.0
  %96 = vmatprep.subr.mxu0 0.0
  %97 = vmatpush1.msra.mxu0 0.0
  %98 = vmatprep.subr.mxu0 0.0
  %99 = vmatpush1.msra.mxu0 0.0
  %100 = vmatprep.subr.mxu0 0.0
  %101 = vmatpush1.msra.mxu0 0.0
  %102 = vmatprep.subr.mxu0 0.0
  %103 = vmatpush1.msra.mxu0 0.0
  %104 = vmatprep.subr.mxu0 0.0
  %105 = vmatpush1.msra.mxu0 0.0
  %106 = vmatprep.subr.mxu0 0.0
  %107 = vmatpush1.msra.mxu0 0.0
  %108 = vmatprep.mubr.f32.mxu0 0.0
  %109 = vmatmul.mubr.f32.gmra.mrb[0].mxu0 %v20
  %v110 = vpop.f32.mrb[0].mxu0
  %v111 = vadd.f32 %v42, %v110
  %v112 = vpop.f32.mrb[0].mxu0
  %113 = vdwg.mxu0
  %v114 = vmax.f32 %v111, 0.0
  %v115 = vld [vmem:[%s3] sm:$0xff]
  %v116 = vld [vmem:[%s3 + $0x8] sm:$0xff]
  %v117 = vld [vmem:[%s3 + $0x10] sm:$0xff]
  %v118 = vld [vmem:[%s3 + $0x18] sm:$0xff]
  %v119 = vld [vmem:[%s3 + $0x20] sm:$0xff]
  %v120 = vld [vmem:[%s3 + $0x28] sm:$0xff]
  %v121 = vld [vmem:[%s3 + $0x30] sm:$0xff]
  %v122 = vld [vmem:[%s3 + $0x38] sm:$0xff]
  %v123 = vld [vmem:[%s3 + $0x40] sm:$0xff]
  %v124 = vld [vmem:[%s3 + $0x48] sm:$0xff]
  %v125 = vld [vmem:[%s3 + $0x50] sm:$0xff]
  %v126 = vld [vmem:[%s3 + $0x58] sm:$0xff]
  %v127 = vld [vmem:[%s3 + $0x60] sm:$0xff]
  %v128 = vld [vmem:[%s3 + $0x68] sm:$0xff]
  %v129 = vld [vmem:[%s3 + $0x70] sm:$0xff]
  %v130 = vld [vmem:[%s3 + $0x78] sm:$0xff]
  %v131 = vld [vmem:[%s3 + $0x80] sm:$0xff]
  %v132 = vld [vmem:[%s3 + $0x88] sm:$0xff]
  %v133 = vld [vmem:[%s3 + $0x90] sm:$0xff]
  %v134 = vld [vmem:[%s3 + $0x98] sm:$0xff]
  %v135 = vld [vmem:[%s3 + $0xa0] sm:$0xff]
  %v136 = vld [vmem:[%s3 + $0xa8] sm:$0xff]
  %v137 = vld [vmem:[%s3 + $0xb0] sm:$0xff]
  %v138 = vld [vmem:[%s3 + $0xb8] sm:$0xff]
  %v139 = vld [vmem:[%s3 + $0xc0] sm:$0xff]
  %v140 = vld [vmem:[%s3 + $0xc8] sm:$0xff]
  %v141 = vld [vmem:[%s3 + $0xd0] sm:$0xff]
  %v142 = vld [vmem:[%s3 + $0xd8] sm:$0xff]
  %v143 = vld [vmem:[%s3 + $0xe0] sm:$0xff]
  %v144 = vld [vmem:[%s3 + $0xe8] sm:$0xff]
  %v145 = vld [vmem:[%s3 + $0xf0] sm:$0xff]
  %v146 = vld [vmem:[%s3 + $0xf8] sm:$0xff]
  %v147 = vld [vmem:[%s3 + $0x100] sm:$0xff]
  %v148 = vld [vmem:[%s3 + $0x108] sm:$0xff]
  %v149 = vld [vmem:[%s3 + $0x110] sm:$0xff]
  %v150 = vld [vmem:[%s3 + $0x118] sm:$0xff]
  %v151 = vld [vmem:[%s3 + $0x120] sm:$0xff]
  %v152 = vld [vmem:[%s3 + $0x128] sm:$0xff]
  %v153 = vld [vmem:[%s3 + $0x130] sm:$0xff]
  %v154 = vld [vmem:[%s3 + $0x138] sm:$0xff]
  %v155 = vld [vmem:[%s3 + $0x140] sm:$0xff]
  %v156 = vld [vmem:[%s3 + $0x148] sm:$0xff]
  %v157 = vld [vmem:[%s3 + $0x150] sm:$0xff]
  %v158 = vld [vmem:[%s3 + $0x158] sm:$0xff]
  %v159 = vld [vmem:[%s3 + $0x160] sm:$0xff]
  %v160 = vld [vmem:[%s3 + $0x168] sm:$0xff]
  %v161 = vld [vmem:[%s3 + $0x170] sm:$0xff]
  %v162 = vld [vmem:[%s3 + $0x178] sm:$0xff]
  %v163 = vld [vmem:[%s3 + $0x180] sm:$0xff]
  %v164 = vld [vmem:[%s3 + $0x188] sm:$0xff]
  %v165 = vld [vmem:[%s3 + $0x190] sm:$0xff]
  %v166 = vld [vmem:[%s3 + $0x198] sm:$0xff]
  %v167 = vld [vmem:[%s3 + $0x1a0] sm:$0xff]
  %v168 = vld [vmem:[%s3 + $0x1a8] sm:$0xff]
  %v169 = vld [vmem:[%s3 + $0x1b0] sm:$0xff]
  %v170 = vld [vmem:[%s3 + $0x1b8] sm:$0xff]
  %v171 = vld [vmem:[%s3 + $0x1c0] sm:$0xff]
  %v172 = vld [vmem:[%s3 + $0x1c8] sm:$0xff]
  %v173 = vld [vmem:[%s3 + $0x1d0] sm:$0xff]
  %v174 = vld [vmem:[%s3 + $0x1d8] sm:$0xff]
  %v175 = vld [vmem:[%s3 + $0x1e0] sm:$0xff]
  %v176 = vld [vmem:[%s3 + $0x1e8] sm:$0xff]
  %v177 = vld [vmem:[%s3 + $0x1f0] sm:$0xff]
  %v178 = vld [vmem:[%s3 + $0x1f8] sm:$0xff]
  %v179 = vld [vmem:[%s3 + $0x200] sm:$0xff]
  %v180 = vld [vmem:[%s3 + $0x208] sm:$0xff]
  %v181 = vld [vmem:[%s3 + $0x210] sm:$0xff]
  %v182 = vld [vmem:[%s3 + $0x218] sm:$0xff]
  %v183 = vld [vmem:[%s3 + $0x220] sm:$0xff]
  %v184 = vld [vmem:[%s3 + $0x228] sm:$0xff]
  %v185 = vld [vmem:[%s3 + $0x230] sm:$0xff]
  %v186 = vld [vmem:[%s3 + $0x238] sm:$0xff]
  %v187 = vld [vmem:[%s3 + $0x240] sm:$0xff]
  %v188 = vld [vmem:[%s3 + $0x248] sm:$0xff]
  %v189 = vld [vmem:[%s3 + $0x250] sm:$0xff]
  %v190 = vld [vmem:[%s3 + $0x258] sm:$0xff]
  %v191 = vld [vmem:[%s3 + $0x260] sm:$0xff]
  %v192 = vld [vmem:[%s3 + $0x268] sm:$0xff]
  %v193 = vld [vmem:[%s3 + $0x270] sm:$0xff]
  %v194 = vld [vmem:[%s3 + $0x278] sm:$0xff]
  %v195 = vld [vmem:[%s3 + $0x280] sm:$0xff]
  %v196 = vld [vmem:[%s3 + $0x288] sm:$0xff]
  %v197 = vld [vmem:[%s3 + $0x290] sm:$0xff]
  %v198 = vld [vmem:[%s3 + $0x298] sm:$0xff]
  %v199 = vld [vmem:[%s3 + $0x2a0] sm:$0xff]
  %v200 = vld [vmem:[%s3 + $0x2a8] sm:$0xff]
  %v201 = vld [vmem:[%s3 + $0x2b0] sm:$0xff]
  %v202 = vld [vmem:[%s3 + $0x2b8] sm:$0xff]
  %v203 = vld [vmem:[%s3 + $0x2c0] sm:$0xff]
  %v204 = vld [vmem:[%s3 + $0x2c8] sm:$0xff]
  %v205 = vld [vmem:[%s3 + $0x2d0] sm:$0xff]
  %v206 = vld [vmem:[%s3 + $0x2d8] sm:$0xff]
  %v207 = vld [vmem:[%s3 + $0x2e0] sm:$0xff]
  %v208 = vld [vmem:[%s3 + $0x2e8] sm:$0xff]
  %v209 = vld [vmem:[%s3 + $0x2f0] sm:$0xff]
  %v210 = vld [vmem:[%s3 + $0x2f8] sm:$0xff]
  %v211 = vld [vmem:[%s3 + $0x300] sm:$0xff]
  %v212 = vld [vmem:[%s3 + $0x308] sm:$0xff]
  %v213 = vld [vmem:[%s3 + $0x310] sm:$0xff]
  %v214 = vld [vmem:[%s3 + $0x318] sm:$0xff]
  %v215 = vld [vmem:[%s3 + $0x320] sm:$0xff]
  %v216 = vld [vmem:[%s3 + $0x328] sm:$0xff]
  %v217 = vld [vmem:[%s3 + $0x330] sm:$0xff]
  %v218 = vld [vmem:[%s3 + $0x338] sm:$0xff]
  %v219 = vld [vmem:[%s3 + $0x340] sm:$0xff]
  %v220 = vld [vmem:[%s3 + $0x348] sm:$0xff]
  %v221 = vld [vmem:[%s3 + $0x350] sm:$0xff]
  %v222 = vld [vmem:[%s3 + $0x358] sm:$0xff]
  %v223 = vld [vmem:[%s3 + $0x360] sm:$0xff]
  %v224 = vld [vmem:[%s3 + $0x368] sm:$0xff]
  %v225 = vld [vmem:[%s3 + $0x370] sm:$0xff]
  %v226 = vld [vmem:[%s3 + $0x378] sm:$0xff]
  %v227 = vld [vmem:[%s3 + $0x380] sm:$0xff]
  %v228 = vld [vmem:[%s3 + $0x388] sm:$0xff]
  %v229 = vld [vmem:[%s3 + $0x390] sm:$0xff]
  %v230 = vld [vmem:[%s3 + $0x398] sm:$0xff]
  %v231 = vld [vmem:[%s3 + $0x3a0] sm:$0xff]
  %v232 = vld [vmem:[%s3 + $0x3a8] sm:$0xff]
  %v233 = vld [vmem:[%s3 + $0x3b0] sm:$0xff]
  %v234 = vld [vmem:[%s3 + $0x3b8] sm:$0xff]
  %v235 = vld [vmem:[%s3 + $0x3c0] sm:$0xff]
  %v236 = vld [vmem:[%s3 + $0x3c8] sm:$0xff]
  %v237 = vld [vmem:[%s3 + $0x3d0] sm:$0xff]
  %v238 = vld [vmem:[%s3 + $0x3d8] sm:$0xff]
  %v239 = vld [vmem:[%s3 + $0x3e0] sm:$0xff]
  %v240 = vld [vmem:[%s3 + $0x3e8] sm:$0xff]
  %v241 = vld [vmem:[%s3 + $0x3f0] sm:$0xff]
  %v242 = vld [vmem:[%s3 + $0x3f8] sm:$0xff]
  %v243 = vld [vmem:[%s3 + $0x400] sm:$0xff]
  %v244 = vld [vmem:[%s3 + $0x408] sm:$0xff]
  %v245 = vld [vmem:[%s3 + $0x410] sm:$0xff]
  %v246 = vld [vmem:[%s3 + $0x418] sm:$0xff]
  %v247 = vld [vmem:[%s3 + $0x420] sm:$0xff]
  %v248 = vld [vmem:[%s3 + $0x428] sm:$0xff]
  %v249 = vld [vmem:[%s3 + $0x430] sm:$0xff]
  %v250 = vld [vmem:[%s3 + $0x438] sm:$0xff]
  %v251 = vld [vmem:[%s3 + $0x440] sm:$0xff]
  %v252 = vld [vmem:[%s3 + $0x448] sm:$0xff]
  %v253 = vld [vmem:[%s3 + $0x450] sm:$0xff]
  %v254 = vld [vmem:[%s3 + $0x458] sm:$0xff]
  %v255 = vld [vmem:[%s3 + $0x460] sm:$0xff]
  %v256 = vld [vmem:[%s3 + $0x468] sm:$0xff]
  %v257 = vld [vmem:[%s3 + $0x470] sm:$0xff]
  %v258 = vld [vmem:[%s3 + $0x478] sm:$0xff]
  %v259 = vld [vmem:[%s4] sm:$0xff]
  %v260 = vld [vmem:[%s4 + $0x8] sm:$0x1]
  %v263 = vlaneseq
  %v264 = vshrl.u32 %v263, 7
  %v265 = vsub.s32 0, %v264
  %v266 = vrot.slane %v259, %v265
  %v267 = vlaneseq
  %v268 = vshrl.u32 %v267, 7
  %v269 = vsub.s32 1, %v268
  %v270 = vrot.slane %v259, %v269
  %v271 = vlaneseq
  %v272 = vshrl.u32 %v271, 7
  %v273 = vsub.s32 2, %v272
  %v274 = vrot.slane %v259, %v273
  %v275 = vlaneseq
  %v276 = vshrl.u32 %v275, 7
  %v277 = vsub.s32 3, %v276
  %v278 = vrot.slane %v259, %v277
  %v279 = vlaneseq
  %v280 = vshrl.u32 %v279, 7
  %v281 = vsub.s32 4, %v280
  %v282 = vrot.slane %v259, %v281
  %v283 = vlaneseq
  %v284 = vshrl.u32 %v283, 7
  %v285 = vsub.s32 5, %v284
  %v286 = vrot.slane %v259, %v285
  %v287 = vlaneseq
  %v288 = vshrl.u32 %v287, 7
  %v289 = vsub.s32 6, %v288
  %v290 = vrot.slane %v259, %v289
  %v291 = vlaneseq
  %v292 = vshrl.u32 %v291, 7
  %v293 = vsub.s32 7, %v292
  %v294 = vrot.slane %v259, %v293
  %v295 = vlaneseq
  %v296 = vshrl.u32 %v295, 7
  %v297 = vsub.s32 0, %v296
  %v298 = vrot.slane %v260, %v297
  %308 = vmatprep.subr.mxu0 %v116
  %309 = vmatpush1.msra.mxu0 %v115
  %310 = vmatprep.subr.mxu0 %v125
  %311 = vmatpush1.msra.mxu0 %v124
  %312 = vmatprep.subr.mxu0 %v134
  %313 = vmatpush1.msra.mxu0 %v133
  %314 = vmatprep.subr.mxu0 %v143
  %315 = vmatpush1.msra.mxu0 %v142
  %316 = vmatprep.subr.mxu0 %v152
  %317 = vmatpush1.msra.mxu0 %v151
  %318 = vmatprep.subr.mxu0 %v161
  %319 = vmatpush1.msra.mxu0 %v160
  %320 = vmatprep.subr.mxu0 %v170
  %321 = vmatpush1.msra.mxu0 %v169
  %322 = vmatprep.subr.mxu0 %v179
  %323 = vmatpush1.msra.mxu0 %v178
  %324 = vmatprep.subr.mxu0 %v188
  %325 = vmatpush1.msra.mxu0 %v187
  %326 = vmatprep.subr.mxu0 %v197
  %327 = vmatpush1.msra.mxu0 %v196
  %328 = vmatprep.subr.mxu0 %v206
  %329 = vmatpush1.msra.mxu0 %v205
  %330 = vmatprep.subr.mxu0 %v215
  %331 = vmatpush1.msra.mxu0 %v214
  %332 = vmatprep.subr.mxu0 %v224
  %333 = vmatpush1.msra.mxu0 %v223
  %334 = vmatprep.subr.mxu0 %v233
  %335 = vmatpush1.msra.mxu0 %v232
  %336 = vmatprep.subr.mxu0 %v242
  %337 = vmatpush1.msra.mxu0 %v241
  %338 = vmatprep.subr.mxu0 %v251
  %339 = vmatpush1.msra.mxu0 %v250
  %340 = vmatprep.subr.mxu0 0.0
  %341 = vmatpush1.msra.mxu0 0.0
  %342 = vmatprep.subr.mxu0 0.0
  %343 = vmatpush1.msra.mxu0 0.0
  %344 = vmatprep.subr.mxu0 0.0
  %345 = vmatpush1.msra.mxu0 0.0
  %346 = vmatprep.subr.mxu0 0.0
  %347 = vmatpush1.msra.mxu0 0.0
  %348 = vmatprep.subr.mxu0 0.0
  %349 = vmatpush1.msra.mxu0 0.0
  %350 = vmatprep.subr.mxu0 0.0
  %351 = vmatpush1.msra.mxu0 0.0
  %352 = vmatprep.subr.mxu0 0.0
  %353 = vmatpush1.msra.mxu0 0.0
  %354 = vmatprep.subr.mxu0 0.0
  %355 = vmatpush1.msra.mxu0 0.0
  %356 = vmatprep.subr.mxu0 0.0
  %357 = vmatpush1.msra.mxu0 0.0
  %358 = vmatprep.subr.mxu0 0.0
  %359 = vmatpush1.msra.mxu0 0.0
  %360 = vmatprep.subr.mxu0 0.0
  %361 = vmatpush1.msra.mxu0 0.0
  %362 = vmatprep.subr.mxu0 0.0
  %363 = vmatpush1.msra.mxu0 0.0
  %364 = vmatprep.subr.mxu0 0.0
  %365 = vmatpush1.msra.mxu0 0.0
  %366 = vmatprep.subr.mxu0 0.0
  %367 = vmatpush1.msra.mxu0 0.0
  %368 = vmatprep.subr.mxu0 0.0
  %369 = vmatpush1.msra.mxu0 0.0
  %370 = vmatprep.subr.mxu0 0.0
  %371 = vmatpush1.msra.mxu0 0.0
  %372 = vmatprep.mubr.f32.mxu0 0.0
  %373 = vmatmul.mubr.f32.gmra.mrb[0].mxu0 %v114
  %v374 = vpop.f32.mrb[0].mxu0
  %v375 = vadd.f32 %v266, %v374
  %v376 = vpop.f32.mrb[0].mxu0
  %v377 = vadd.f32 %v270, %v376
  %378 = vdwg.mxu0
  %379 = vmatprep.subr.mxu0 %v118
  %380 = vmatpush1.msra.mxu0 %v117
  %381 = vmatprep.subr.mxu0 %v127
  %382 = vmatpush1.msra.mxu0 %v126
  %383 = vmatprep.subr.mxu0 %v136
  %384 = vmatpush1.msra.mxu0 %v135
  %385 = vmatprep.subr.mxu0 %v145
  %386 = vmatpush1.msra.mxu0 %v144
  %387 = vmatprep.subr.mxu0 %v154
  %388 = vmatpush1.msra.mxu0 %v153
  %389 = vmatprep.subr.mxu0 %v163
  %390 = vmatpush1.msra.mxu0 %v162
  %391 = vmatprep.subr.mxu0 %v172
  %392 = vmatpush1.msra.mxu0 %v171
  %393 = vmatprep.subr.mxu0 %v181
  %394 = vmatpush1.msra.mxu0 %v180
  %395 = vmatprep.subr.mxu0 %v190
  %396 = vmatpush1.msra.mxu0 %v189
  %397 = vmatprep.subr.mxu0 %v199
  %398 = vmatpush1.msra.mxu0 %v198
  %399 = vmatprep.subr.mxu0 %v208
  %400 = vmatpush1.msra.mxu0 %v207
  %401 = vmatprep.subr.mxu0 %v217
  %402 = vmatpush1.msra.mxu0 %v216
  %403 = vmatprep.subr.mxu0 %v226
  %404 = vmatpush1.msra.mxu0 %v225
  %405 = vmatprep.subr.mxu0 %v235
  %406 = vmatpush1.msra.mxu0 %v234
  %407 = vmatprep.subr.mxu0 %v244
  %408 = vmatpush1.msra.mxu0 %v243
  %409 = vmatprep.subr.mxu0 %v253
  %410 = vmatpush1.msra.mxu0 %v252
  %411 = vmatprep.subr.mxu0 0.0
  %412 = vmatpush1.msra.mxu0 0.0
  %413 = vmatprep.subr.mxu0 0.0
  %414 = vmatpush1.msra.mxu0 0.0
  %415 = vmatprep.subr.mxu0 0.0
  %416 = vmatpush1.msra.mxu0 0.0
  %417 = vmatprep.subr.mxu0 0.0
  %418 = vmatpush1.msra.mxu0 0.0
  %419 = vmatprep.subr.mxu0 0.0
  %420 = vmatpush1.msra.mxu0 0.0
  %421 = vmatprep.subr.mxu0 0.0
  %422 = vmatpush1.msra.mxu0 0.0
  %423 = vmatprep.subr.mxu0 0.0
  %424 = vmatpush1.msra.mxu0 0.0
  %425 = vmatprep.subr.mxu0 0.0
  %426 = vmatpush1.msra.mxu0 0.0
  %427 = vmatprep.subr.mxu0 0.0
  %428 = vmatpush1.msra.mxu0 0.0
  %429 = vmatprep.subr.mxu0 0.0
  %430 = vmatpush1.msra.mxu0 0.0
  %431 = vmatprep.subr.mxu0 0.0
  %432 = vmatpush1.msra.mxu0 0.0
  %433 = vmatprep.subr.mxu0 0.0
  %434 = vmatpush1.msra.mxu0 0.0
  %435 = vmatprep.subr.mxu0 0.0
  %436 = vmatpush1.msra.mxu0 0.0
  %437 = vmatprep.subr.mxu0 0.0
  %438 = vmatpush1.msra.mxu0 0.0
  %439 = vmatprep.subr.mxu0 0.0
  %440 = vmatpush1.msra.mxu0 0.0
  %441 = vmatprep.subr.mxu0 0.0
  %442 = vmatpush1.msra.mxu0 0.0
  %443 = vmatprep.mubr.f32.mxu0 0.0
  %444 = vmatmul.mubr.f32.gmra.mrb[0].mxu0 %v114
  %v445 = vpop.f32.mrb[0].mxu0
  %v446 = vadd.f32 %v274, %v445
  %v447 = vpop.f32.mrb[0].mxu0
  %v448 = vadd.f32 %v278, %v447
  %449 = vdwg.mxu0
  %450 = vmatprep.subr.mxu0 %v120
  %451 = vmatpush1.msra.mxu0 %v119
  %452 = vmatprep.subr.mxu0 %v129
  %453 = vmatpush1.msra.mxu0 %v128
  %454 = vmatprep.subr.mxu0 %v138
  %455 = vmatpush1.msra.mxu0 %v137
  %456 = vmatprep.subr.mxu0 %v147
  %457 = vmatpush1.msra.mxu0 %v146
  %458 = vmatprep.subr.mxu0 %v156
  %459 = vmatpush1.msra.mxu0 %v155
  %460 = vmatprep.subr.mxu0 %v165
  %461 = vmatpush1.msra.mxu0 %v164
  %462 = vmatprep.subr.mxu0 %v174
  %463 = vmatpush1.msra.mxu0 %v173
  %464 = vmatprep.subr.mxu0 %v183
  %465 = vmatpush1.msra.mxu0 %v182
  %466 = vmatprep.subr.mxu0 %v192
  %467 = vmatpush1.msra.mxu0 %v191
  %468 = vmatprep.subr.mxu0 %v201
  %469 = vmatpush1.msra.mxu0 %v200
  %470 = vmatprep.subr.mxu0 %v210
  %471 = vmatpush1.msra.mxu0 %v209
  %472 = vmatprep.subr.mxu0 %v219
  %473 = vmatpush1.msra.mxu0 %v218
  %474 = vmatprep.subr.mxu0 %v228
  %475 = vmatpush1.msra.mxu0 %v227
  %476 = vmatprep.subr.mxu0 %v237
  %477 = vmatpush1.msra.mxu0 %v236
  %478 = vmatprep.subr.mxu0 %v246
  %479 = vmatpush1.msra.mxu0 %v245
  %480 = vmatprep.subr.mxu0 %v255
  %481 = vmatpush1.msra.mxu0 %v254
  %482 = vmatprep.subr.mxu0 0.0
  %483 = vmatpush1.msra.mxu0 0.0
  %484 = vmatprep.subr.mxu0 0.0
  %485 = vmatpush1.msra.mxu0 0.0
  %486 = vmatprep.subr.mxu0 0.0
  %487 = vmatpush1.msra.mxu0 0.0
  %488 = vmatprep.subr.mxu0 0.0
  %489 = vmatpush1.msra.mxu0 0.0
  %490 = vmatprep.subr.mxu0 0.0
  %491 = vmatpush1.msra.mxu0 0.0
  %492 = vmatprep.subr.mxu0 0.0
  %493 = vmatpush1.msra.mxu0 0.0
  %494 = vmatprep.subr.mxu0 0.0
  %495 = vmatpush1.msra.mxu0 0.0
  %496 = vmatprep.subr.mxu0 0.0
  %497 = vmatpush1.msra.mxu0 0.0
  %498 = vmatprep.subr.mxu0 0.0
  %499 = vmatpush1.msra.mxu0 0.0
  %500 = vmatprep.subr.mxu0 0.0
  %501 = vmatpush1.msra.mxu0 0.0
  %502 = vmatprep.subr.mxu0 0.0
  %503 = vmatpush1.msra.mxu0 0.0
  %504 = vmatprep.subr.mxu0 0.0
  %505 = vmatpush1.msra.mxu0 0.0
  %506 = vmatprep.subr.mxu0 0.0
  %507 = vmatpush1.msra.mxu0 0.0
  %508 = vmatprep.subr.mxu0 0.0
  %509 = vmatpush1.msra.mxu0 0.0
  %510 = vmatprep.subr.mxu0 0.0
  %511 = vmatpush1.msra.mxu0 0.0
  %512 = vmatprep.subr.mxu0 0.0
  %513 = vmatpush1.msra.mxu0 0.0
  %514 = vmatprep.mubr.f32.mxu0 0.0
  %515 = vmatmul.mubr.f32.gmra.mrb[0].mxu0 %v114
  %v516 = vpop.f32.mrb[0].mxu0
  %v517 = vadd.f32 %v282, %v516
  %v518 = vpop.f32.mrb[0].mxu0
  %v519 = vadd.f32 %v286, %v518
  %520 = vdwg.mxu0
  %521 = vmatprep.subr.mxu0 %v122
  %522 = vmatpush1.msra.mxu0 %v121
  %523 = vmatprep.subr.mxu0 %v131
  %524 = vmatpush1.msra.mxu0 %v130
  %525 = vmatprep.subr.mxu0 %v140
  %526 = vmatpush1.msra.mxu0 %v139
  %527 = vmatprep.subr.mxu0 %v149
  %528 = vmatpush1.msra.mxu0 %v148
  %529 = vmatprep.subr.mxu0 %v158
  %530 = vmatpush1.msra.mxu0 %v157
  %531 = vmatprep.subr.mxu0 %v167
  %532 = vmatpush1.msra.mxu0 %v166
  %533 = vmatprep.subr.mxu0 %v176
  %534 = vmatpush1.msra.mxu0 %v175
  %535 = vmatprep.subr.mxu0 %v185
  %536 = vmatpush1.msra.mxu0 %v184
  %537 = vmatprep.subr.mxu0 %v194
  %538 = vmatpush1.msra.mxu0 %v193
  %539 = vmatprep.subr.mxu0 %v203
  %540 = vmatpush1.msra.mxu0 %v202
  %541 = vmatprep.subr.mxu0 %v212
  %542 = vmatpush1.msra.mxu0 %v211
  %543 = vmatprep.subr.mxu0 %v221
  %544 = vmatpush1.msra.mxu0 %v220
  %545 = vmatprep.subr.mxu0 %v230
  %546 = vmatpush1.msra.mxu0 %v229
  %547 = vmatprep.subr.mxu0 %v239
  %548 = vmatpush1.msra.mxu0 %v238
  %549 = vmatprep.subr.mxu0 %v248
  %550 = vmatpush1.msra.mxu0 %v247
  %551 = vmatprep.subr.mxu0 %v257
  %552 = vmatpush1.msra.mxu0 %v256
  %553 = vmatprep.subr.mxu0 0.0
  %554 = vmatpush1.msra.mxu0 0.0
  %555 = vmatprep.subr.mxu0 0.0
  %556 = vmatpush1.msra.mxu0 0.0
  %557 = vmatprep.subr.mxu0 0.0
  %558 = vmatpush1.msra.mxu0 0.0
  %559 = vmatprep.subr.mxu0 0.0
  %560 = vmatpush1.msra.mxu0 0.0
  %561 = vmatprep.subr.mxu0 0.0
  %562 = vmatpush1.msra.mxu0 0.0
  %563 = vmatprep.subr.mxu0 0.0
  %564 = vmatpush1.msra.mxu0 0.0
  %565 = vmatprep.subr.mxu0 0.0
  %566 = vmatpush1.msra.mxu0 0.0
  %567 = vmatprep.subr.mxu0 0.0
  %568 = vmatpush1.msra.mxu0 0.0
  %569 = vmatprep.subr.mxu0 0.0
  %570 = vmatpush1.msra.mxu0 0.0
  %571 = vmatprep.subr.mxu0 0.0
  %572 = vmatpush1.msra.mxu0 0.0
  %573 = vmatprep.subr.mxu0 0.0
  %574 = vmatpush1.msra.mxu0 0.0
  %575 = vmatprep.subr.mxu0 0.0
  %576 = vmatpush1.msra.mxu0 0.0
  %577 = vmatprep.subr.mxu0 0.0
  %578 = vmatpush1.msra.mxu0 0.0
  %579 = vmatprep.subr.mxu0 0.0
  %580 = vmatpush1.msra.mxu0 0.0
  %581 = vmatprep.subr.mxu0 0.0
  %582 = vmatpush1.msra.mxu0 0.0
  %583 = vmatprep.subr.mxu0 0.0
  %584 = vmatpush1.msra.mxu0 0.0
  %585 = vmatprep.mubr.f32.mxu0 0.0
  %586 = vmatmul.mubr.f32.gmra.mrb[0].mxu0 %v114
  %v587 = vpop.f32.mrb[0].mxu0
  %v588 = vadd.f32 %v290, %v587
  %v589 = vpop.f32.mrb[0].mxu0
  %v590 = vadd.f32 %v294, %v589
  %591 = vdwg.mxu0
  %592 = vmatprep.subr.mxu0 0.0
  %593 = vmatpush1.msra.mxu0 %v123
  %594 = vmatprep.subr.mxu0 0.0
  %595 = vmatpush1.msra.mxu0 %v132
  %596 = vmatprep.subr.mxu0 0.0
  %597 = vmatpush1.msra.mxu0 %v141
  %598 = vmatprep.subr.mxu0 0.0
  %599 = vmatpush1.msra.mxu0 %v150
  %600 = vmatprep.subr.mxu0 0.0
  %601 = vmatpush1.msra.mxu0 %v159
  %602 = vmatprep.subr.mxu0 0.0
  %603 = vmatpush1.msra.mxu0 %v168
  %604 = vmatprep.subr.mxu0 0.0
  %605 = vmatpush1.msra.mxu0 %v177
  %606 = vmatprep.subr.mxu0 0.0
  %607 = vmatpush1.msra.mxu0 %v186
  %608 = vmatprep.subr.mxu0 0.0
  %609 = vmatpush1.msra.mxu0 %v195
  %610 = vmatprep.subr.mxu0 0.0
  %611 = vmatpush1.msra.mxu0 %v204
  %612 = vmatprep.subr.mxu0 0.0
  %613 = vmatpush1.msra.mxu0 %v213
  %614 = vmatprep.subr.mxu0 0.0
  %615 = vmatpush1.msra.mxu0 %v222
  %616 = vmatprep.subr.mxu0 0.0
  %617 = vmatpush1.msra.mxu0 %v231
  %618 = vmatprep.subr.mxu0 0.0
  %619 = vmatpush1.msra.mxu0 %v240
  %620 = vmatprep.subr.mxu0 0.0
  %621 = vmatpush1.msra.mxu0 %v249
  %622 = vmatprep.subr.mxu0 0.0
  %623 = vmatpush1.msra.mxu0 %v258
  %624 = vmatprep.subr.mxu0 0.0
  %625 = vmatpush1.msra.mxu0 0.0
  %626 = vmatprep.subr.mxu0 0.0
  %627 = vmatpush1.msra.mxu0 0.0
  %628 = vmatprep.subr.mxu0 0.0
  %629 = vmatpush1.msra.mxu0 0.0
  %630 = vmatprep.subr.mxu0 0.0
  %631 = vmatpush1.msra.mxu0 0.0
  %632 = vmatprep.subr.mxu0 0.0
  %633 = vmatpush1.msra.mxu0 0.0
  %634 = vmatprep.subr.mxu0 0.0
  %635 = vmatpush1.msra.mxu0 0.0
  %636 = vmatprep.subr.mxu0 0.0
  %637 = vmatpush1.msra.mxu0 0.0
  %638 = vmatprep.subr.mxu0 0.0
  %639 = vmatpush1.msra.mxu0 0.0
  %640 = vmatprep.subr.mxu0 0.0
  %641 = vmatpush1.msra.mxu0 0.0
  %642 = vmatprep.subr.mxu0 0.0
  %643 = vmatpush1.msra.mxu0 0.0
  %644 = vmatprep.subr.mxu0 0.0
  %645 = vmatpush1.msra.mxu0 0.0
  %646 = vmatprep.subr.mxu0 0.0
  %647 = vmatpush1.msra.mxu0 0.0
  %648 = vmatprep.subr.mxu0 0.0
  %649 = vmatpush1.msra.mxu0 0.0
  %650 = vmatprep.subr.mxu0 0.0
  %651 = vmatpush1.msra.mxu0 0.0
  %652 = vmatprep.subr.mxu0 0.0
  %653 = vmatpush1.msra.mxu0 0.0
  %654 = vmatprep.subr.mxu0 0.0
  %655 = vmatpush1.msra.mxu0 0.0
  %656 = vmatprep.mubr.f32.mxu0 0.0
  %657 = vmatmul.mubr.f32.gmra.mrb[0].mxu0 %v114
  %v658 = vpop.f32.mrb[0].mxu0
  %v659 = vadd.f32 %v298, %v658
  %v660 = vpop.f32.mrb[0].mxu0
  %661 = vdwg.mxu0
  %v662 = vmax.f32 %v375, 0.0
  %v663 = vmax.f32 %v377, 0.0
  %v664 = vmax.f32 %v446, 0.0
  %v665 = vmax.f32 %v448, 0.0
  %v666 = vmax.f32 %v517, 0.0
  %v667 = vmax.f32 %v519, 0.0
  %v668 = vmax.f32 %v588, 0.0
  %v669 = vmax.f32 %v590, 0.0
  %v670 = vmax.f32 %v659, 0.0
  %671 = vst [vmem:[%s5] sm:$0xff] %v662
  %672 = vst [vmem:[%s5 + $0x8] sm:$0xff] %v663
  %673 = vst [vmem:[%s5 + $0x10] sm:$0xff] %v664
  %674 = vst [vmem:[%s5 + $0x18] sm:$0xff] %v665
  %675 = vst [vmem:[%s5 + $0x20] sm:$0xff] %v666
  %676 = vst [vmem:[%s5 + $0x28] sm:$0xff] %v667
  %677 = vst [vmem:[%s5 + $0x30] sm:$0xff] %v668
  %678 = vst [vmem:[%s5 + $0x38] sm:$0xff] %v669
  %679 = vst [vmem:[%s5 + $0x40] sm:$0xff] %v670
  // Predicated region
  $region22: #{decoder_forward.3} parent=0 // pred_check
    _
  $region23: #{decoder_forward.3} parent=0 // pred_check_branch
    %681 = sbr.rel (0) target = $region25
  $region24: #{decoder_forward.3} parent=0 // pred_region
    _
  $region25: #{decoder_forward.3} parent=0 // pred_fallthru
    _
  // Predicated region
  $region26: #{decoder_forward.3} parent=0 // pred_check
    _
  $region27: #{decoder_forward.3} parent=0 // pred_check_branch
    %683 = sbr.rel (0) target = $region29
  $region28: #{decoder_forward.3} parent=0 // pred_region
    _
  $region29: #{decoder_forward.3} parent=0 // pred_fallthru
    _

// kernel: decoder_forward.4
$region0: #{decoder_forward.4}
  #allocation0 [shape = 'u32[]', space=smem, size = 0x4, offset = 0x4, fixed_abs, tag = 'smem constant byte address 0x4 - core index']
  #allocation1 [shape = 'u32[144,128]{1,0:T(1,128)}', space=vmem, size = 0x12000, scoped, tag = 'internal scratch']
  %s0 = inlined_call_operand.vmem [shape: f32[104,128], index: 0, kind: input, shape index: {}]
  %s1 = inlined_call_operand.vmem [shape: f32[128,64], index: 1, kind: input, shape index: {}]
  %s2 = inlined_call_operand.vmem [shape: f32[1,64], index: 2, kind: input, shape index: {}]
  %s3 = inlined_call_operand.vmem [shape: f32[1,64], index: 3, kind: input, shape index: {}]
  %s4 = inlined_call_operand.vmem [shape: f32[104,64], index: 4, kind: output, shape index: {}]
  %s5 = sld [smem:[#allocation0]]
  $region26: #{decoder_forward.4} parent=0
    _
  %s7 = ssub.s32 1, %s5
  %s8 = scalar_select 0, %s7, %s5
  // Predicated region
  $region2: #{decoder_forward.4} parent=0 // pred_check
    _
  $region3: #{decoder_forward.4} parent=0 // pred_check_branch
    %10 = sbr.rel (0) target = $region5
  $region4: #{decoder_forward.4} parent=0 // pred_region
    _
  $region5: #{decoder_forward.4} parent=0 // pred_fallthru
    _
  // Predicated region
  $region6: #{decoder_forward.4} parent=0 // pred_check
    _
  $region7: #{decoder_forward.4} parent=0 // pred_check_branch
    %12 = sbr.rel (0) target = $region9
  $region8: #{decoder_forward.4} parent=0 // pred_region
    _
  $region9: #{decoder_forward.4} parent=0 // pred_fallthru
    _
  // Predicated region
  $region10: #{decoder_forward.4} parent=0 // pred_check
    _
  $region11: #{decoder_forward.4} parent=0 // pred_check_branch
    %14 = sbr.rel (0) target = $region13
  $region12: #{decoder_forward.4} parent=0 // pred_region
    _
  $region13: #{decoder_forward.4} parent=0 // pred_fallthru
    _
  // Predicated region
  $region14: #{decoder_forward.4} parent=0 // pred_check
    _
  $region15: #{decoder_forward.4} parent=0 // pred_check_branch
    %16 = sbr.rel (0) target = $region17
  $region16: #{decoder_forward.4} parent=0 // pred_region
    _
  $region17: #{decoder_forward.4} parent=0 // pred_fallthru
    _
  %v17 = vld [vmem:[%s0] sm:$0xff]
  %v18 = vld [vmem:[%s0 + $0x8] sm:$0xff]
  %v19 = vld [vmem:[%s0 + $0x10] sm:$0xff]
  %v20 = vld [vmem:[%s0 + $0x18] sm:$0xff]
  %v21 = vld [vmem:[%s0 + $0x20] sm:$0xff]
  %v22 = vld [vmem:[%s0 + $0x28] sm:$0xff]
  %v23 = vld [vmem:[%s0 + $0x30] sm:$0xff]
  %v24 = vld [vmem:[%s0 + $0x38] sm:$0xff]
  %v25 = vld [vmem:[%s0 + $0x40] sm:$0xff]
  %v26 = vld [vmem:[%s0 + $0x48] sm:$0xff]
  %v27 = vld [vmem:[%s0 + $0x50] sm:$0xff]
  %v28 = vld [vmem:[%s0 + $0x58] sm:$0xff]
  %v29 = vld [vmem:[%s0 + $0x60] sm:$0xff]
  %v30 = vld [vmem:[%s1] sm:$0xff]
  %v31 = vld [vmem:[%s1 + $0x8] sm:$0xff]
  %v32 = vld [vmem:[%s1 + $0x10] sm:$0xff]
  %v33 = vld [vmem:[%s1 + $0x18] sm:$0xff]
  %v34 = vld [vmem:[%s1 + $0x20] sm:$0xff]
  %v35 = vld [vmem:[%s1 + $0x28] sm:$0xff]
  %v36 = vld [vmem:[%s1 + $0x30] sm:$0xff]
  %v37 = vld [vmem:[%s1 + $0x38] sm:$0xff]
  %v38 = vld [vmem:[%s1 + $0x40] sm:$0xff]
  %v39 = vld [vmem:[%s1 + $0x48] sm:$0xff]
  %v40 = vld [vmem:[%s1 + $0x50] sm:$0xff]
  %v41 = vld [vmem:[%s1 + $0x58] sm:$0xff]
  %v42 = vld [vmem:[%s1 + $0x60] sm:$0xff]
  %v43 = vld [vmem:[%s1 + $0x68] sm:$0xff]
  %v44 = vld [vmem:[%s1 + $0x70] sm:$0xff]
  %v45 = vld [vmem:[%s1 + $0x78] sm:$0xff]
  %46 = vmatprep.subr.mxu0 0.0
  %47 = vmatpush1.msra.mxu0 %v30
  %48 = vmatprep.subr.mxu0 0.0
  %49 = vmatpush1.msra.mxu0 %v31
  %50 = vmatprep.subr.mxu0 0.0
  %51 = vmatpush1.msra.mxu0 %v32
  %52 = vmatprep.subr.mxu0 0.0
  %53 = vmatpush1.msra.mxu0 %v33
  %54 = vmatprep.subr.mxu0 0.0
  %55 = vmatpush1.msra.mxu0 %v34
  %56 = vmatprep.subr.mxu0 0.0
  %57 = vmatpush1.msra.mxu0 %v35
  %58 = vmatprep.subr.mxu0 0.0
  %59 = vmatpush1.msra.mxu0 %v36
  %60 = vmatprep.subr.mxu0 0.0
  %61 = vmatpush1.msra.mxu0 %v37
  %62 = vmatprep.subr.mxu0 0.0
  %63 = vmatpush1.msra.mxu0 %v38
  %64 = vmatprep.subr.mxu0 0.0
  %65 = vmatpush1.msra.mxu0 %v39
  %66 = vmatprep.subr.mxu0 0.0
  %67 = vmatpush1.msra.mxu0 %v40
  %68 = vmatprep.subr.mxu0 0.0
  %69 = vmatpush1.msra.mxu0 %v41
  %70 = vmatprep.subr.mxu0 0.0
  %71 = vmatpush1.msra.mxu0 %v42
  %72 = vmatprep.subr.mxu0 0.0
  %73 = vmatpush1.msra.mxu0 %v43
  %74 = vmatprep.subr.mxu0 0.0
  %75 = vmatpush1.msra.mxu0 %v44
  %76 = vmatprep.subr.mxu0 0.0
  %77 = vmatpush1.msra.mxu0 %v45
  %78 = vmatprep.subr.mxu0 0.0
  %79 = vmatpush1.msra.mxu0 0.0
  %80 = vmatprep.subr.mxu0 0.0
  %81 = vmatpush1.msra.mxu0 0.0
  %82 = vmatprep.subr.mxu0 0.0
  %83 = vmatpush1.msra.mxu0 0.0
  %84 = vmatprep.subr.mxu0 0.0
  %85 = vmatpush1.msra.mxu0 0.0
  %86 = vmatprep.subr.mxu0 0.0
  %87 = vmatpush1.msra.mxu0 0.0
  %88 = vmatprep.subr.mxu0 0.0
  %89 = vmatpush1.msra.mxu0 0.0
  %90 = vmatprep.subr.mxu0 0.0
  %91 = vmatpush1.msra.mxu0 0.0
  %92 = vmatprep.subr.mxu0 0.0
  %93 = vmatpush1.msra.mxu0 0.0
  %94 = vmatprep.subr.mxu0 0.0
  %95 = vmatpush1.msra.mxu0 0.0
  %96 = vmatprep.subr.mxu0 0.0
  %97 = vmatpush1.msra.mxu0 0.0
  %98 = vmatprep.subr.mxu0 0.0
  %99 = vmatpush1.msra.mxu0 0.0
  %100 = vmatprep.subr.mxu0 0.0
  %101 = vmatpush1.msra.mxu0 0.0
  %102 = vmatprep.subr.mxu0 0.0
  %103 = vmatpush1.msra.mxu0 0.0
  %104 = vmatprep.subr.mxu0 0.0
  %105 = vmatpush1.msra.mxu0 0.0
  %106 = vmatprep.subr.mxu0 0.0
  %107 = vmatpush1.msra.mxu0 0.0
  %108 = vmatprep.subr.mxu0 0.0
  %109 = vmatpush1.msra.mxu0 0.0
  %110 = vmatprep.mubr.f32.mxu0 0.0
  %111 = vmatmul.mubr.f32.gmra.mrb[0].mxu0 %v17
  %v112 = vpop.f32.mrb[0].mxu0
  %v113 = vadd.f32 0.0, %v112
  %v114 = vpop.f32.mrb[0].mxu0
  %115 = vmatprep.mubr.f32.mxu0 0.0
  %116 = vmatmul.mubr.f32.gmra.mrb[0].mxu0 %v18
  %v117 = vpop.f32.mrb[0].mxu0
  %v118 = vadd.f32 0.0, %v117
  %v119 = vpop.f32.mrb[0].mxu0
  %120 = vmatprep.mubr.f32.mxu0 0.0
  %121 = vmatmul.mubr.f32.gmra.mrb[0].mxu0 %v19
  %v122 = vpop.f32.mrb[0].mxu0
  %v123 = vadd.f32 0.0, %v122
  %v124 = vpop.f32.mrb[0].mxu0
  %125 = vmatprep.mubr.f32.mxu0 0.0
  %126 = vmatmul.mubr.f32.gmra.mrb[0].mxu0 %v20
  %v127 = vpop.f32.mrb[0].mxu0
  %v128 = vadd.f32 0.0, %v127
  %v129 = vpop.f32.mrb[0].mxu0
  %130 = vmatprep.mubr.f32.mxu0 0.0
  %131 = vmatmul.mubr.f32.gmra.mrb[0].mxu0 %v21
  %v132 = vpop.f32.mrb[0].mxu0
  %v133 = vadd.f32 0.0, %v132
  %v134 = vpop.f32.mrb[0].mxu0
  %135 = vmatprep.mubr.f32.mxu0 0.0
  %136 = vmatmul.mubr.f32.gmra.mrb[0].mxu0 %v22
  %v137 = vpop.f32.mrb[0].mxu0
  %v138 = vadd.f32 0.0, %v137
  %v139 = vpop.f32.mrb[0].mxu0
  %140 = vmatprep.mubr.f32.mxu0 0.0
  %141 = vmatmul.mubr.f32.gmra.mrb[0].mxu0 %v23
  %v142 = vpop.f32.mrb[0].mxu0
  %v143 = vadd.f32 0.0, %v142
  %v144 = vpop.f32.mrb[0].mxu0
  %145 = vmatprep.mubr.f32.mxu0 0.0
  %146 = vmatmul.mubr.f32.gmra.mrb[0].mxu0 %v24
  %v147 = vpop.f32.mrb[0].mxu0
  %v148 = vadd.f32 0.0, %v147
  %v149 = vpop.f32.mrb[0].mxu0
  %150 = vmatprep.mubr.f32.mxu0 0.0
  %151 = vmatmul.mubr.f32.gmra.mrb[0].mxu0 %v25
  %v152 = vpop.f32.mrb[0].mxu0
  %v153 = vadd.f32 0.0, %v152
  %v154 = vpop.f32.mrb[0].mxu0
  %155 = vmatprep.mubr.f32.mxu0 0.0
  %156 = vmatmul.mubr.f32.gmra.mrb[0].mxu0 %v26
  %v157 = vpop.f32.mrb[0].mxu0
  %v158 = vadd.f32 0.0, %v157
  %v159 = vpop.f32.mrb[0].mxu0
  %160 = vmatprep.mubr.f32.mxu0 0.0
  %161 = vmatmul.mubr.f32.gmra.mrb[0].mxu0 %v27
  %v162 = vpop.f32.mrb[0].mxu0
  %v163 = vadd.f32 0.0, %v162
  %v164 = vpop.f32.mrb[0].mxu0
  %165 = vmatprep.mubr.f32.mxu0 0.0
  %166 = vmatmul.mubr.f32.gmra.mrb[0].mxu0 %v28
  %v167 = vpop.f32.mrb[0].mxu0
  %v168 = vadd.f32 0.0, %v167
  %v169 = vpop.f32.mrb[0].mxu0
  %170 = vmatprep.mubr.f32.mxu0 0.0
  %171 = vmatmul.mubr.f32.gmra.mrb[0].mxu0 %v29
  %v172 = vpop.f32.mrb[0].mxu0
  %v173 = vadd.f32 0.0, %v172
  %v174 = vpop.f32.mrb[0].mxu0
  %175 = vdwg.mxu0
  %v176 = vld [vmem:[%s2] sm:$0x1]
  %v177 = vld [vmem:[%s3] sm:$0x1]
  %vm178 = vcmask 523264
  %v179 = vsel %vm178, %v113, 0.0
  %v180 = vsel %vm178, %v118, 0.0
  %v181 = vadd.f32 %v179, %v180
  %v182 = vsel %vm178, %v123, 0.0
  %v183 = vadd.f32 %v181, %v182
  %v184 = vsel %vm178, %v128, 0.0
  %v185 = vadd.f32 %v183, %v184
  %v186 = vsel %vm178, %v133, 0.0
  %v187 = vadd.f32 %v185, %v186
  %v188 = vsel %vm178, %v138, 0.0
  %v189 = vadd.f32 %v187, %v188
  %v190 = vsel %vm178, %v143, 0.0
  %v191 = vadd.f32 %v189, %v190
  %v192 = vsel %vm178, %v148, 0.0
  %v193 = vadd.f32 %v191, %v192
  %v194 = vsel %vm178, %v153, 0.0
  %v195 = vadd.f32 %v193, %v194
  %v196 = vsel %vm178, %v158, 0.0
  %v197 = vadd.f32 %v195, %v196
  %v198 = vsel %vm178, %v163, 0.0
  %v199 = vadd.f32 %v197, %v198
  %v200 = vsel %vm178, %v168, 0.0
  %v201 = vadd.f32 %v199, %v200
  %v202 = vsel %vm178, %v173, 0.0
  %v203 = vadd.f32 %v201, %v202
  %v204 = vrot.slane %v203, 4
  %v205 = vadd.f32 %v203, %v204
  %v206 = vrot.slane %v205, 2
  %v207 = vadd.f32 %v205, %v206
  %v208 = vrot.slane %v207, 1
  %v209 = vadd.f32 %v207, %v208
  %v210 = vmul.f32 %v113, %v113
  %v211 = vmul.f32 %v118, %v118
  %v212 = vmul.f32 %v123, %v123
  %v213 = vmul.f32 %v128, %v128
  %v214 = vmul.f32 %v133, %v133
  %v215 = vmul.f32 %v138, %v138
  %v216 = vmul.f32 %v143, %v143
  %v217 = vmul.f32 %v148, %v148
  %v218 = vmul.f32 %v153, %v153
  %v219 = vmul.f32 %v158, %v158
  %v220 = vmul.f32 %v163, %v163
  %v221 = vmul.f32 %v168, %v168
  %v222 = vmul.f32 %v173, %v173
  %v223 = vsel %vm178, %v210, 0.0
  %v224 = vsel %vm178, %v211, 0.0
  %v225 = vadd.f32 %v223, %v224
  %v226 = vsel %vm178, %v212, 0.0
  %v227 = vadd.f32 %v225, %v226
  %v228 = vsel %vm178, %v213, 0.0
  %v229 = vadd.f32 %v227, %v228
  %v230 = vsel %vm178, %v214, 0.0
  %v231 = vadd.f32 %v229, %v230
  %v232 = vsel %vm178, %v215, 0.0
  %v233 = vadd.f32 %v231, %v232
  %v234 = vsel %vm178, %v216, 0.0
  %v235 = vadd.f32 %v233, %v234
  %v236 = vsel %vm178, %v217, 0.0
  %v237 = vadd.f32 %v235, %v236
  %v238 = vsel %vm178, %v218, 0.0
  %v239 = vadd.f32 %v237, %v238
  %v240 = vsel %vm178, %v219, 0.0
  %v241 = vadd.f32 %v239, %v240
  %v242 = vsel %vm178, %v220, 0.0
  %v243 = vadd.f32 %v241, %v242
  %v244 = vsel %vm178, %v221, 0.0
  %v245 = vadd.f32 %v243, %v244
  %v246 = vsel %vm178, %v222, 0.0
  %v247 = vadd.f32 %v245, %v246
  %v248 = vrot.slane %v247, 4
  %v249 = vadd.f32 %v247, %v248
  %v250 = vrot.slane %v249, 2
  %v251 = vadd.f32 %v249, %v250
  %v252 = vrot.slane %v251, 1
  %v253 = vadd.f32 %v251, %v252
  %255 = vrot.lane.b32.xlu0 %v209, 112
  %v256 = vpop.permute.xlu0 %255
  %v258 = vadd.f32 %v209, %v256
  %260 = vrot.lane.b32.xlu0 %v253, 112
  %v261 = vpop.permute.xlu0 %260
  %v263 = vadd.f32 %v253, %v261
  %264 = vrot.lane.b32.xlu0 %v209, 96
  %v265 = vpop.permute.xlu0 %264
  %v267 = vadd.f32 %v258, %v265
  %268 = vrot.lane.b32.xlu0 %v253, 96
  %v269 = vpop.permute.xlu0 %268
  %v271 = vadd.f32 %v263, %v269
  %272 = vrot.lane.b32.xlu0 %v209, 80
  %v273 = vpop.permute.xlu0 %272
  %v275 = vadd.f32 %v267, %v273
  %276 = vrot.lane.b32.xlu0 %v253, 80
  %v277 = vpop.permute.xlu0 %276
  %v279 = vadd.f32 %v271, %v277
  %v280 = vrcp.pop 338.0
  %v281 = vmul.f32 %v275, %v280
  %v282 = vmul.f32 %v279, %v280
  %v283 = vmul.f32 %v281, %v281
  %v284 = vsub.f32 %v282, %v283
  %v285 = vmax.f32 %v284, 0.0
  %v286 = vadd.f32 %v285, 1e-05
  %v287 = vrsqrt.pop %v286
  %289 = vrot.lane.b32.xlu0 %v281, 16
  %v290 = vpop.permute.xlu0 %289
  %292 = vrot.lane.b32.xlu0 %v281, 32
  %v293 = vpop.permute.xlu0 %292
  %295 = vrot.lane.b32.xlu0 %v281, 48
  %v296 = vpop.permute.xlu0 %295
  %vm298 = vcmask 130048
  %v299 = vsel %vm298, %v281, %v290
  %vm300 = vcmask 261120
  %v301 = vsel %vm300, %v299, %v293
  %vm302 = vcmask 392192
  %v303 = vsel %vm302, %v301, %v296
  %305 = vrot.lane.b32.xlu0 %v287, 16
  %v306 = vpop.permute.xlu0 %305
  %308 = vrot.lane.b32.xlu0 %v287, 32
  %v309 = vpop.permute.xlu0 %308
  %311 = vrot.lane.b32.xlu0 %v287, 48
  %v312 = vpop.permute.xlu0 %311
  %v314 = vsel %vm298, %v287, %v306
  %v315 = vsel %vm300, %v314, %v309
  %v316 = vsel %vm302, %v315, %v312
  %v317 = vlaneseq
  %v318 = vshrl.u32 %v317, 7
  %v319 = vsub.s32 0, %v318
  %v320 = vrot.slane %v303, %v319
  %v321 = vsub.f32 %v113, %v320
  %v322 = vsub.f32 %v118, %v320
  %v323 = vsub.f32 %v123, %v320
  %v324 = vsub.f32 %v128, %v320
  %v325 = vsub.f32 %v133, %v320
  %v326 = vsub.f32 %v138, %v320
  %v327 = vsub.f32 %v143, %v320
  %v328 = vsub.f32 %v148, %v320
  %v329 = vsub.f32 %v153, %v320
  %v330 = vsub.f32 %v158, %v320
  %v331 = vsub.f32 %v163, %v320
  %v332 = vsub.f32 %v168, %v320
  %v333 = vsub.f32 %v173, %v320
  %v334 = vlaneseq
  %v335 = vshrl.u32 %v334, 7
  %v336 = vsub.s32 0, %v335
  %v337 = vrot.slane %v316, %v336
  %v338 = vmul.f32 %v321, %v337
  %v339 = vmul.f32 %v322, %v337
  %v340 = vmul.f32 %v323, %v337
  %v341 = vmul.f32 %v324, %v337
  %v342 = vmul.f32 %v325, %v337
  %v343 = vmul.f32 %v326, %v337
  %v344 = vmul.f32 %v327, %v337
  %v345 = vmul.f32 %v328, %v337
  %v346 = vmul.f32 %v329, %v337
  %v347 = vmul.f32 %v330, %v337
  %v348 = vmul.f32 %v331, %v337
  %v349 = vmul.f32 %v332, %v337
  %v350 = vmul.f32 %v333, %v337
  %v352 = vlaneseq
  %v353 = vshrl.u32 %v352, 7
  %v354 = vsub.s32 0, %v353
  %v355 = vrot.slane %v176, %v354
  %v357 = vmul.f32 %v338, %v355
  %v358 = vmul.f32 %v339, %v355
  %v359 = vmul.f32 %v340, %v355
  %v360 = vmul.f32 %v341, %v355
  %v361 = vmul.f32 %v342, %v355
  %v362 = vmul.f32 %v343, %v355
  %v363 = vmul.f32 %v344, %v355
  %v364 = vmul.f32 %v345, %v355
  %v365 = vmul.f32 %v346, %v355
  %v366 = vmul.f32 %v347, %v355
  %v367 = vmul.f32 %v348, %v355
  %v368 = vmul.f32 %v349, %v355
  %v369 = vmul.f32 %v350, %v355
  %v371 = vlaneseq
  %v372 = vshrl.u32 %v371, 7
  %v373 = vsub.s32 0, %v372
  %v374 = vrot.slane %v177, %v373
  %v376 = vadd.f32 %v357, %v374
  %v377 = vadd.f32 %v358, %v374
  %v378 = vadd.f32 %v359, %v374
  %v379 = vadd.f32 %v360, %v374
  %v380 = vadd.f32 %v361, %v374
  %v381 = vadd.f32 %v362, %v374
  %v382 = vadd.f32 %v363, %v374
  %v383 = vadd.f32 %v364, %v374
  %v384 = vadd.f32 %v365, %v374
  %v385 = vadd.f32 %v366, %v374
  %v386 = vadd.f32 %v367, %v374
  %v387 = vadd.f32 %v368, %v374
  %v388 = vadd.f32 %v369, %v374
  %v389 = vmax.f32 %v376, 0.0
  %v390 = vmax.f32 %v377, 0.0
  %v391 = vmax.f32 %v378, 0.0
  %v392 = vmax.f32 %v379, 0.0
  %v393 = vmax.f32 %v380, 0.0
  %v394 = vmax.f32 %v381, 0.0
  %v395 = vmax.f32 %v382, 0.0
  %v396 = vmax.f32 %v383, 0.0
  %v397 = vmax.f32 %v384, 0.0
  %v398 = vmax.f32 %v385, 0.0
  %v399 = vmax.f32 %v386, 0.0
  %v400 = vmax.f32 %v387, 0.0
  %v401 = vmax.f32 %v388, 0.0
  %402 = vst.msk [vmem:[%s4] sm:$0xff] %vm178, %v389
  %403 = vst.msk [vmem:[%s4 + $0x8] sm:$0xff] %vm178, %v390
  %404 = vst.msk [vmem:[%s4 + $0x10] sm:$0xff] %vm178, %v391
  %405 = vst.msk [vmem:[%s4 + $0x18] sm:$0xff] %vm178, %v392
  %406 = vst.msk [vmem:[%s4 + $0x20] sm:$0xff] %vm178, %v393
  %407 = vst.msk [vmem:[%s4 + $0x28] sm:$0xff] %vm178, %v394
  %408 = vst.msk [vmem:[%s4 + $0x30] sm:$0xff] %vm178, %v395
  %409 = vst.msk [vmem:[%s4 + $0x38] sm:$0xff] %vm178, %v396
  %410 = vst.msk [vmem:[%s4 + $0x40] sm:$0xff] %vm178, %v397
  %411 = vst.msk [vmem:[%s4 + $0x48] sm:$0xff] %vm178, %v398
  %412 = vst.msk [vmem:[%s4 + $0x50] sm:$0xff] %vm178, %v399
  %413 = vst.msk [vmem:[%s4 + $0x58] sm:$0xff] %vm178, %v400
  %414 = vst.msk [vmem:[%s4 + $0x60] sm:$0xff] %vm178, %v401
  // Predicated region
  $region18: #{decoder_forward.4} parent=0 // pred_check
    _
  $region19: #{decoder_forward.4} parent=0 // pred_check_branch
    %416 = sbr.rel (0) target = $region21
  $region20: #{decoder_forward.4} parent=0 // pred_region
    _
  $region21: #{decoder_forward.4} parent=0 // pred_fallthru
    _
  // Predicated region
  $region22: #{decoder_forward.4} parent=0 // pred_check
    _
  $region23: #{decoder_forward.4} parent=0 // pred_check_branch
    %418 = sbr.rel (0) target = $region25
  $region24: #{decoder_forward.4} parent=0 // pred_region
    _
  $region25: #{decoder_forward.4} parent=0 // pred_fallthru
    _

// kernel: decoder_forward.5
$region0: #{decoder_forward.5}
  #allocation0 [shape = 'u32[]', space=smem, size = 0x4, offset = 0x4, fixed_abs, tag = 'smem constant byte address 0x4 - core index']
  #allocation1 [shape = 'u32[144,128]{1,0:T(1,128)}', space=vmem, size = 0x12000, scoped, tag = 'internal scratch']
  %s0 = inlined_call_operand.vmem [shape: f32[392,64], index: 0, kind: input, shape index: {}]
  %s1 = inlined_call_operand.vmem [shape: f32[64,32], index: 1, kind: input, shape index: {}]
  %s2 = inlined_call_operand.vmem [shape: f32[1,32], index: 2, kind: input, shape index: {}]
  %s3 = inlined_call_operand.vmem [shape: f32[1,32], index: 3, kind: input, shape index: {}]
  %s4 = inlined_call_operand.vmem [shape: f32[32,4], index: 4, kind: input, shape index: {}]
  %s5 = inlined_call_operand.vmem [shape: f32[1,4], index: 5, kind: input, shape index: {}]
  %s6 = inlined_call_operand.vmem [shape: f32[392,4], index: 6, kind: output, shape index: {}]
  %s7 = sld [smem:[#allocation0]]
  $region34: #{decoder_forward.5} parent=0
    _
  %s9 = ssub.s32 1, %s7
  %s10 = scalar_select 0, %s9, %s7
  // Predicated region
  $region2: #{decoder_forward.5} parent=0 // pred_check
    _
  $region3: #{decoder_forward.5} parent=0 // pred_check_branch
    %12 = sbr.rel (0) target = $region5
  $region4: #{decoder_forward.5} parent=0 // pred_region
    _
  $region5: #{decoder_forward.5} parent=0 // pred_fallthru
    _
  // Predicated region
  $region6: #{decoder_forward.5} parent=0 // pred_check
    _
  $region7: #{decoder_forward.5} parent=0 // pred_check_branch
    %14 = sbr.rel (0) target = $region9
  $region8: #{decoder_forward.5} parent=0 // pred_region
    _
  $region9: #{decoder_forward.5} parent=0 // pred_fallthru
    _
  // Predicated region
  $region10: #{decoder_forward.5} parent=0 // pred_check
    _
  $region11: #{decoder_forward.5} parent=0 // pred_check_branch
    %16 = sbr.rel (0) target = $region13
  $region12: #{decoder_forward.5} parent=0 // pred_region
    _
  $region13: #{decoder_forward.5} parent=0 // pred_fallthru
    _
  // Predicated region
  $region14: #{decoder_forward.5} parent=0 // pred_check
    _
  $region15: #{decoder_forward.5} parent=0 // pred_check_branch
    %18 = sbr.rel (0) target = $region17
  $region16: #{decoder_forward.5} parent=0 // pred_region
    _
  $region17: #{decoder_forward.5} parent=0 // pred_fallthru
    _
  // Predicated region
  $region18: #{decoder_forward.5} parent=0 // pred_check
    _
  $region19: #{decoder_forward.5} parent=0 // pred_check_branch
    %20 = sbr.rel (0) target = $region21
  $region20: #{decoder_forward.5} parent=0 // pred_region
    _
  $region21: #{decoder_forward.5} parent=0 // pred_fallthru
    _
  // Predicated region
  $region22: #{decoder_forward.5} parent=0 // pred_check
    _
  $region23: #{decoder_forward.5} parent=0 // pred_check_branch
    %22 = sbr.rel (0) target = $region25
  $region24: #{decoder_forward.5} parent=0 // pred_region
    _
  $region25: #{decoder_forward.5} parent=0 // pred_fallthru
    _
  %v23 = vld [vmem:[%s0] sm:$0xff]
  %v24 = vld [vmem:[%s0 + $0x8] sm:$0xff]
  %v25 = vld [vmem:[%s0 + $0x10] sm:$0xff]
  %v26 = vld [vmem:[%s0 + $0x18] sm:$0xff]
  %v27 = vld [vmem:[%s0 + $0x20] sm:$0xff]
  %v28 = vld [vmem:[%s0 + $0x28] sm:$0xff]
  %v29 = vld [vmem:[%s0 + $0x30] sm:$0xff]
  %v30 = vld [vmem:[%s0 + $0x38] sm:$0xff]
  %v31 = vld [vmem:[%s0 + $0x40] sm:$0xff]
  %v32 = vld [vmem:[%s0 + $0x48] sm:$0xff]
  %v33 = vld [vmem:[%s0 + $0x50] sm:$0xff]
  %v34 = vld [vmem:[%s0 + $0x58] sm:$0xff]
  %v35 = vld [vmem:[%s0 + $0x60] sm:$0xff]
  %v36 = vld [vmem:[%s0 + $0x68] sm:$0xff]
  %v37 = vld [vmem:[%s0 + $0x70] sm:$0xff]
  %v38 = vld [vmem:[%s0 + $0x78] sm:$0xff]
  %v39 = vld [vmem:[%s0 + $0x80] sm:$0xff]
  %v40 = vld [vmem:[%s0 + $0x88] sm:$0xff]
  %v41 = vld [vmem:[%s0 + $0x90] sm:$0xff]
  %v42 = vld [vmem:[%s0 + $0x98] sm:$0xff]
  %v43 = vld [vmem:[%s0 + $0xa0] sm:$0xff]
  %v44 = vld [vmem:[%s0 + $0xa8] sm:$0xff]
  %v45 = vld [vmem:[%s0 + $0xb0] sm:$0xff]
  %v46 = vld [vmem:[%s0 + $0xb8] sm:$0xff]
  %v47 = vld [vmem:[%s0 + $0xc0] sm:$0xff]
  %v48 = vld [vmem:[%s0 + $0xc8] sm:$0xff]
  %v49 = vld [vmem:[%s0 + $0xd0] sm:$0xff]
  %v50 = vld [vmem:[%s0 + $0xd8] sm:$0xff]
  %v51 = vld [vmem:[%s0 + $0xe0] sm:$0xff]
  %v52 = vld [vmem:[%s0 + $0xe8] sm:$0xff]
  %v53 = vld [vmem:[%s0 + $0xf0] sm:$0xff]
  %v54 = vld [vmem:[%s0 + $0xf8] sm:$0xff]
  %v55 = vld [vmem:[%s0 + $0x100] sm:$0xff]
  %v56 = vld [vmem:[%s0 + $0x108] sm:$0xff]
  %v57 = vld [vmem:[%s0 + $0x110] sm:$0xff]
  %v58 = vld [vmem:[%s0 + $0x118] sm:$0xff]
  %v59 = vld [vmem:[%s0 + $0x120] sm:$0xff]
  %v60 = vld [vmem:[%s0 + $0x128] sm:$0xff]
  %v61 = vld [vmem:[%s0 + $0x130] sm:$0xff]
  %v62 = vld [vmem:[%s0 + $0x138] sm:$0xff]
  %v63 = vld [vmem:[%s0 + $0x140] sm:$0xff]
  %v64 = vld [vmem:[%s0 + $0x148] sm:$0xff]
  %v65 = vld [vmem:[%s0 + $0x150] sm:$0xff]
  %v66 = vld [vmem:[%s0 + $0x158] sm:$0xff]
  %v67 = vld [vmem:[%s0 + $0x160] sm:$0xff]
  %v68 = vld [vmem:[%s0 + $0x168] sm:$0xff]
  %v69 = vld [vmem:[%s0 + $0x170] sm:$0xff]
  %v70 = vld [vmem:[%s0 + $0x178] sm:$0xff]
  %v71 = vld [vmem:[%s0 + $0x180] sm:$0xff]
  %v72 = vld [vmem:[%s1] sm:$0xff]
  %v73 = vld [vmem:[%s1 + $0x8] sm:$0xff]
  %v74 = vld [vmem:[%s1 + $0x10] sm:$0xff]
  %v75 = vld [vmem:[%s1 + $0x18] sm:$0xff]
  %v76 = vld [vmem:[%s1 + $0x20] sm:$0xff]
  %v77 = vld [vmem:[%s1 + $0x28] sm:$0xff]
  %v78 = vld [vmem:[%s1 + $0x30] sm:$0xff]
  %v79 = vld [vmem:[%s1 + $0x38] sm:$0xff]
  %vm80 = vcmask 523264
  %v82 = vsel %vm80, %v23, 0
  %v85 = vsel %vm80, %v24, 0
  %v88 = vsel %vm80, %v25, 0
  %v91 = vsel %vm80, %v26, 0
  %v94 = vsel %vm80, %v27, 0
  %v97 = vsel %vm80, %v28, 0
  %v100 = vsel %vm80, %v29, 0
  %v103 = vsel %vm80, %v30, 0
  %v106 = vsel %vm80, %v31, 0
  %v109 = vsel %vm80, %v32, 0
  %v112 = vsel %vm80, %v33, 0
  %v115 = vsel %vm80, %v34, 0
  %v118 = vsel %vm80, %v35, 0
  %v121 = vsel %vm80, %v36, 0
  %v124 = vsel %vm80, %v37, 0
  %v127 = vsel %vm80, %v38, 0
  %v130 = vsel %vm80, %v39, 0
  %v133 = vsel %vm80, %v40, 0
  %v136 = vsel %vm80, %v41, 0
  %v139 = vsel %vm80, %v42, 0
  %v142 = vsel %vm80, %v43, 0
  %v145 = vsel %vm80, %v44, 0
  %v148 = vsel %vm80, %v45, 0
  %v151 = vsel %vm80, %v46, 0
  %v154 = vsel %vm80, %v47, 0
  %v157 = vsel %vm80, %v48, 0
  %v160 = vsel %vm80, %v49, 0
  %v163 = vsel %vm80, %v50, 0
  %v166 = vsel %vm80, %v51, 0
  %v169 = vsel %vm80, %v52, 0
  %v172 = vsel %vm80, %v53, 0
  %v175 = vsel %vm80, %v54, 0
  %v178 = vsel %vm80, %v55, 0
  %v181 = vsel %vm80, %v56, 0
  %v184 = vsel %vm80, %v57, 0
  %v187 = vsel %vm80, %v58, 0
  %v190 = vsel %vm80, %v59, 0
  %v193 = vsel %vm80, %v60, 0
  %v196 = vsel %vm80, %v61, 0
  %v199 = vsel %vm80, %v62, 0
  %v202 = vsel %vm80, %v63, 0
  %v205 = vsel %vm80, %v64, 0
  %v208 = vsel %vm80, %v65, 0
  %v211 = vsel %vm80, %v66, 0
  %v214 = vsel %vm80, %v67, 0
  %v217 = vsel %vm80, %v68, 0
  %v220 = vsel %vm80, %v69, 0
  %v223 = vsel %vm80, %v70, 0
  %v226 = vsel %vm80, %v71, 0
  %228 = vmatprep.subr.mxu0 0.0
  %229 = vmatpush1.msra.mxu0 %v72
  %230 = vmatprep.subr.mxu0 0.0
  %231 = vmatpush1.msra.mxu0 %v73
  %232 = vmatprep.subr.mxu0 0.0
  %233 = vmatpush1.msra.mxu0 %v74
  %234 = vmatprep.subr.mxu0 0.0
  %235 = vmatpush1.msra.mxu0 %v75
  %236 = vmatprep.subr.mxu0 0.0
  %237 = vmatpush1.msra.mxu0 %v76
  %238 = vmatprep.subr.mxu0 0.0
  %239 = vmatpush1.msra.mxu0 %v77
  %240 = vmatprep.subr.mxu0 0.0
  %241 = vmatpush1.msra.mxu0 %v78
  %242 = vmatprep.subr.mxu0 0.0
  %243 = vmatpush1.msra.mxu0 %v79
  %244 = vmatprep.subr.mxu0 0.0
  %245 = vmatpush1.msra.mxu0 0.0
  %246 = vmatprep.subr.mxu0 0.0
  %247 = vmatpush1.msra.mxu0 0.0
  %248 = vmatprep.subr.mxu0 0.0
  %249 = vmatpush1.msra.mxu0 0.0
  %250 = vmatprep.subr.mxu0 0.0
  %251 = vmatpush1.msra.mxu0 0.0
  %252 = vmatprep.subr.mxu0 0.0
  %253 = vmatpush1.msra.mxu0 0.0
  %254 = vmatprep.subr.mxu0 0.0
  %255 = vmatpush1.msra.mxu0 0.0
  %256 = vmatprep.subr.mxu0 0.0
  %257 = vmatpush1.msra.mxu0 0.0
  %258 = vmatprep.subr.mxu0 0.0
  %259 = vmatpush1.msra.mxu0 0.0
  %260 = vmatprep.subr.mxu0 0.0
  %261 = vmatpush1.msra.mxu0 0.0
  %262 = vmatprep.subr.mxu0 0.0
  %263 = vmatpush1.msra.mxu0 0.0
  %264 = vmatprep.subr.mxu0 0.0
  %265 = vmatpush1.msra.mxu0 0.0
  %266 = vmatprep.subr.mxu0 0.0
  %267 = vmatpush1.msra.mxu0 0.0
  %268 = vmatprep.subr.mxu0 0.0
  %269 = vmatpush1.msra.mxu0 0.0
  %270 = vmatprep.subr.mxu0 0.0
  %271 = vmatpush1.msra.mxu0 0.0
  %272 = vmatprep.subr.mxu0 0.0
  %273 = vmatpush1.msra.mxu0 0.0
  %274 = vmatprep.subr.mxu0 0.0
  %275 = vmatpush1.msra.mxu0 0.0
  %276 = vmatprep.subr.mxu0 0.0
  %277 = vmatpush1.msra.mxu0 0.0
  %278 = vmatprep.subr.mxu0 0.0
  %279 = vmatpush1.msra.mxu0 0.0
  %280 = vmatprep.subr.mxu0 0.0
  %281 = vmatpush1.msra.mxu0 0.0
  %282 = vmatprep.subr.mxu0 0.0
  %283 = vmatpush1.msra.mxu0 0.0
  %284 = vmatprep.subr.mxu0 0.0
  %285 = vmatpush1.msra.mxu0 0.0
  %286 = vmatprep.subr.mxu0 0.0
  %287 = vmatpush1.msra.mxu0 0.0
  %288 = vmatprep.subr.mxu0 0.0
  %289 = vmatpush1.msra.mxu0 0.0
  %290 = vmatprep.subr.mxu0 0.0
  %291 = vmatpush1.msra.mxu0 0.0
  %292 = vmatprep.mubr.f32.mxu0 0.0
  %293 = vmatmul.mubr.f32.gmra.mrb[0].mxu0 %v82
  %v294 = vpop.f32.mrb[0].mxu0
  %v295 = vadd.f32 0.0, %v294
  %v296 = vpop.f32.mrb[0].mxu0
  %297 = vmatprep.mubr.f32.mxu0 0.0
  %298 = vmatmul.mubr.f32.gmra.mrb[0].mxu0 %v85
  %v299 = vpop.f32.mrb[0].mxu0
  %v300 = vadd.f32 0.0, %v299
  %v301 = vpop.f32.mrb[0].mxu0
  %302 = vmatprep.mubr.f32.mxu0 0.0
  %303 = vmatmul.mubr.f32.gmra.mrb[0].mxu0 %v88
  %v304 = vpop.f32.mrb[0].mxu0
  %v305 = vadd.f32 0.0, %v304
  %v306 = vpop.f32.mrb[0].mxu0
  %307 = vmatprep.mubr.f32.mxu0 0.0
  %308 = vmatmul.mubr.f32.gmra.mrb[0].mxu0 %v91
  %v309 = vpop.f32.mrb[0].mxu0
  %v310 = vadd.f32 0.0, %v309
  %v311 = vpop.f32.mrb[0].mxu0
  %312 = vmatprep.mubr.f32.mxu0 0.0
  %313 = vmatmul.mubr.f32.gmra.mrb[0].mxu0 %v94
  %v314 = vpop.f32.mrb[0].mxu0
  %v315 = vadd.f32 0.0, %v314
  %v316 = vpop.f32.mrb[0].mxu0
  %317 = vmatprep.mubr.f32.mxu0 0.0
  %318 = vmatmul.mubr.f32.gmra.mrb[0].mxu0 %v97
  %v319 = vpop.f32.mrb[0].mxu0
  %v320 = vadd.f32 0.0, %v319
  %v321 = vpop.f32.mrb[0].mxu0
  %322 = vmatprep.mubr.f32.mxu0 0.0
  %323 = vmatmul.mubr.f32.gmra.mrb[0].mxu0 %v100
  %v324 = vpop.f32.mrb[0].mxu0
  %v325 = vadd.f32 0.0, %v324
  %v326 = vpop.f32.mrb[0].mxu0
  %327 = vmatprep.mubr.f32.mxu0 0.0
  %328 = vmatmul.mubr.f32.gmra.mrb[0].mxu0 %v103
  %v329 = vpop.f32.mrb[0].mxu0
  %v330 = vadd.f32 0.0, %v329
  %v331 = vpop.f32.mrb[0].mxu0
  %332 = vmatprep.mubr.f32.mxu0 0.0
  %333 = vmatmul.mubr.f32.gmra.mrb[0].mxu0 %v106
  %v334 = vpop.f32.mrb[0].mxu0
  %v335 = vadd.f32 0.0, %v334
  %v336 = vpop.f32.mrb[0].mxu0
  %337 = vmatprep.mubr.f32.mxu0 0.0
  %338 = vmatmul.mubr.f32.gmra.mrb[0].mxu0 %v109
  %v339 = vpop.f32.mrb[0].mxu0
  %v340 = vadd.f32 0.0, %v339
  %v341 = vpop.f32.mrb[0].mxu0
  %342 = vmatprep.mubr.f32.mxu0 0.0
  %343 = vmatmul.mubr.f32.gmra.mrb[0].mxu0 %v112
  %v344 = vpop.f32.mrb[0].mxu0
  %v345 = vadd.f32 0.0, %v344
  %v346 = vpop.f32.mrb[0].mxu0
  %347 = vmatprep.mubr.f32.mxu0 0.0
  %348 = vmatmul.mubr.f32.gmra.mrb[0].mxu0 %v115
  %v349 = vpop.f32.mrb[0].mxu0
  %v350 = vadd.f32 0.0, %v349
  %v351 = vpop.f32.mrb[0].mxu0
  %352 = vmatprep.mubr.f32.mxu0 0.0
  %353 = vmatmul.mubr.f32.gmra.mrb[0].mxu0 %v118
  %v354 = vpop.f32.mrb[0].mxu0
  %v355 = vadd.f32 0.0, %v354
  %v356 = vpop.f32.mrb[0].mxu0
  %357 = vmatprep.mubr.f32.mxu0 0.0
  %358 = vmatmul.mubr.f32.gmra.mrb[0].mxu0 %v121
  %v359 = vpop.f32.mrb[0].mxu0
  %v360 = vadd.f32 0.0, %v359
  %v361 = vpop.f32.mrb[0].mxu0
  %362 = vmatprep.mubr.f32.mxu0 0.0
  %363 = vmatmul.mubr.f32.gmra.mrb[0].mxu0 %v124
  %v364 = vpop.f32.mrb[0].mxu0
  %v365 = vadd.f32 0.0, %v364
  %v366 = vpop.f32.mrb[0].mxu0
  %367 = vmatprep.mubr.f32.mxu0 0.0
  %368 = vmatmul.mubr.f32.gmra.mrb[0].mxu0 %v127
  %v369 = vpop.f32.mrb[0].mxu0
  %v370 = vadd.f32 0.0, %v369
  %v371 = vpop.f32.mrb[0].mxu0
  %372 = vmatprep.mubr.f32.mxu0 0.0
  %373 = vmatmul.mubr.f32.gmra.mrb[0].mxu0 %v130
  %v374 = vpop.f32.mrb[0].mxu0
  %v375 = vadd.f32 0.0, %v374
  %v376 = vpop.f32.mrb[0].mxu0
  %377 = vmatprep.mubr.f32.mxu0 0.0
  %378 = vmatmul.mubr.f32.gmra.mrb[0].mxu0 %v133
  %v379 = vpop.f32.mrb[0].mxu0
  %v380 = vadd.f32 0.0, %v379
  %v381 = vpop.f32.mrb[0].mxu0
  %382 = vmatprep.mubr.f32.mxu0 0.0
  %383 = vmatmul.mubr.f32.gmra.mrb[0].mxu0 %v136
  %v384 = vpop.f32.mrb[0].mxu0
  %v385 = vadd.f32 0.0, %v384
  %v386 = vpop.f32.mrb[0].mxu0
  %387 = vmatprep.mubr.f32.mxu0 0.0
  %388 = vmatmul.mubr.f32.gmra.mrb[0].mxu0 %v139
  %v389 = vpop.f32.mrb[0].mxu0
  %v390 = vadd.f32 0.0, %v389
  %v391 = vpop.f32.mrb[0].mxu0
  %392 = vmatprep.mubr.f32.mxu0 0.0
  %393 = vmatmul.mubr.f32.gmra.mrb[0].mxu0 %v142
  %v394 = vpop.f32.mrb[0].mxu0
  %v395 = vadd.f32 0.0, %v394
  %v396 = vpop.f32.mrb[0].mxu0
  %397 = vmatprep.mubr.f32.mxu0 0.0
  %398 = vmatmul.mubr.f32.gmra.mrb[0].mxu0 %v145
  %v399 = vpop.f32.mrb[0].mxu0
  %v400 = vadd.f32 0.0, %v399
  %v401 = vpop.f32.mrb[0].mxu0
  %402 = vmatprep.mubr.f32.mxu0 0.0
  %403 = vmatmul.mubr.f32.gmra.mrb[0].mxu0 %v148
  %v404 = vpop.f32.mrb[0].mxu0
  %v405 = vadd.f32 0.0, %v404
  %v406 = vpop.f32.mrb[0].mxu0
  %407 = vmatprep.mubr.f32.mxu0 0.0
  %408 = vmatmul.mubr.f32.gmra.mrb[0].mxu0 %v151
  %v409 = vpop.f32.mrb[0].mxu0
  %v410 = vadd.f32 0.0, %v409
  %v411 = vpop.f32.mrb[0].mxu0
  %412 = vmatprep.mubr.f32.mxu0 0.0
  %413 = vmatmul.mubr.f32.gmra.mrb[0].mxu0 %v154
  %v414 = vpop.f32.mrb[0].mxu0
  %v415 = vadd.f32 0.0, %v414
  %v416 = vpop.f32.mrb[0].mxu0
  %417 = vmatprep.mubr.f32.mxu0 0.0
  %418 = vmatmul.mubr.f32.gmra.mrb[0].mxu0 %v157
  %v419 = vpop.f32.mrb[0].mxu0
  %v420 = vadd.f32 0.0, %v419
  %v421 = vpop.f32.mrb[0].mxu0
  %422 = vmatprep.mubr.f32.mxu0 0.0
  %423 = vmatmul.mubr.f32.gmra.mrb[0].mxu0 %v160
  %v424 = vpop.f32.mrb[0].mxu0
  %v425 = vadd.f32 0.0, %v424
  %v426 = vpop.f32.mrb[0].mxu0
  %427 = vmatprep.mubr.f32.mxu0 0.0
  %428 = vmatmul.mubr.f32.gmra.mrb[0].mxu0 %v163
  %v429 = vpop.f32.mrb[0].mxu0
  %v430 = vadd.f32 0.0, %v429
  %v431 = vpop.f32.mrb[0].mxu0
  %432 = vmatprep.mubr.f32.mxu0 0.0
  %433 = vmatmul.mubr.f32.gmra.mrb[0].mxu0 %v166
  %v434 = vpop.f32.mrb[0].mxu0
  %v435 = vadd.f32 0.0, %v434
  %v436 = vpop.f32.mrb[0].mxu0
  %437 = vmatprep.mubr.f32.mxu0 0.0
  %438 = vmatmul.mubr.f32.gmra.mrb[0].mxu0 %v169
  %v439 = vpop.f32.mrb[0].mxu0
  %v440 = vadd.f32 0.0, %v439
  %v441 = vpop.f32.mrb[0].mxu0
  %442 = vmatprep.mubr.f32.mxu0 0.0
  %443 = vmatmul.mubr.f32.gmra.mrb[0].mxu0 %v172
  %v444 = vpop.f32.mrb[0].mxu0
  %v445 = vadd.f32 0.0, %v444
  %v446 = vpop.f32.mrb[0].mxu0
  %447 = vmatprep.mubr.f32.mxu0 0.0
  %448 = vmatmul.mubr.f32.gmra.mrb[0].mxu0 %v175
  %v449 = vpop.f32.mrb[0].mxu0
  %v450 = vadd.f32 0.0, %v449
  %v451 = vpop.f32.mrb[0].mxu0
  %452 = vmatprep.mubr.f32.mxu0 0.0
  %453 = vmatmul.mubr.f32.gmra.mrb[0].mxu0 %v178
  %v454 = vpop.f32.mrb[0].mxu0
  %v455 = vadd.f32 0.0, %v454
  %v456 = vpop.f32.mrb[0].mxu0
  %457 = vmatprep.mubr.f32.mxu0 0.0
  %458 = vmatmul.mubr.f32.gmra.mrb[0].mxu0 %v181
  %v459 = vpop.f32.mrb[0].mxu0
  %v460 = vadd.f32 0.0, %v459
  %v461 = vpop.f32.mrb[0].mxu0
  %462 = vmatprep.mubr.f32.mxu0 0.0
  %463 = vmatmul.mubr.f32.gmra.mrb[0].mxu0 %v184
  %v464 = vpop.f32.mrb[0].mxu0
  %v465 = vadd.f32 0.0, %v464
  %v466 = vpop.f32.mrb[0].mxu0
  %467 = vmatprep.mubr.f32.mxu0 0.0
  %468 = vmatmul.mubr.f32.gmra.mrb[0].mxu0 %v187
  %v469 = vpop.f32.mrb[0].mxu0
  %v470 = vadd.f32 0.0, %v469
  %v471 = vpop.f32.mrb[0].mxu0
  %472 = vmatprep.mubr.f32.mxu0 0.0
  %473 = vmatmul.mubr.f32.gmra.mrb[0].mxu0 %v190
  %v474 = vpop.f32.mrb[0].mxu0
  %v475 = vadd.f32 0.0, %v474
  %v476 = vpop.f32.mrb[0].mxu0
  %477 = vmatprep.mubr.f32.mxu0 0.0
  %478 = vmatmul.mubr.f32.gmra.mrb[0].mxu0 %v193
  %v479 = vpop.f32.mrb[0].mxu0
  %v480 = vadd.f32 0.0, %v479
  %v481 = vpop.f32.mrb[0].mxu0
  %482 = vmatprep.mubr.f32.mxu0 0.0
  %483 = vmatmul.mubr.f32.gmra.mrb[0].mxu0 %v196
  %v484 = vpop.f32.mrb[0].mxu0
  %v485 = vadd.f32 0.0, %v484
  %v486 = vpop.f32.mrb[0].mxu0
  %487 = vmatprep.mubr.f32.mxu0 0.0
  %488 = vmatmul.mubr.f32.gmra.mrb[0].mxu0 %v199
  %v489 = vpop.f32.mrb[0].mxu0
  %v490 = vadd.f32 0.0, %v489
  %v491 = vpop.f32.mrb[0].mxu0
  %492 = vmatprep.mubr.f32.mxu0 0.0
  %493 = vmatmul.mubr.f32.gmra.mrb[0].mxu0 %v202
  %v494 = vpop.f32.mrb[0].mxu0
  %v495 = vadd.f32 0.0, %v494
  %v496 = vpop.f32.mrb[0].mxu0
  %497 = vmatprep.mubr.f32.mxu0 0.0
  %498 = vmatmul.mubr.f32.gmra.mrb[0].mxu0 %v205
  %v499 = vpop.f32.mrb[0].mxu0
  %v500 = vadd.f32 0.0, %v499
  %v501 = vpop.f32.mrb[0].mxu0
  %502 = vmatprep.mubr.f32.mxu0 0.0
  %503 = vmatmul.mubr.f32.gmra.mrb[0].mxu0 %v208
  %v504 = vpop.f32.mrb[0].mxu0
  %v505 = vadd.f32 0.0, %v504
  %v506 = vpop.f32.mrb[0].mxu0
  %507 = vmatprep.mubr.f32.mxu0 0.0
  %508 = vmatmul.mubr.f32.gmra.mrb[0].mxu0 %v211
  %v509 = vpop.f32.mrb[0].mxu0
  %v510 = vadd.f32 0.0, %v509
  %v511 = vpop.f32.mrb[0].mxu0
  %512 = vmatprep.mubr.f32.mxu0 0.0
  %513 = vmatmul.mubr.f32.gmra.mrb[0].mxu0 %v214
  %v514 = vpop.f32.mrb[0].mxu0
  %v515 = vadd.f32 0.0, %v514
  %v516 = vpop.f32.mrb[0].mxu0
  %517 = vmatprep.mubr.f32.mxu0 0.0
  %518 = vmatmul.mubr.f32.gmra.mrb[0].mxu0 %v217
  %v519 = vpop.f32.mrb[0].mxu0
  %v520 = vadd.f32 0.0, %v519
  %v521 = vpop.f32.mrb[0].mxu0
  %522 = vmatprep.mubr.f32.mxu0 0.0
  %523 = vmatmul.mubr.f32.gmra.mrb[0].mxu0 %v220
  %v524 = vpop.f32.mrb[0].mxu0
  %v525 = vadd.f32 0.0, %v524
  %v526 = vpop.f32.mrb[0].mxu0
  %527 = vmatprep.mubr.f32.mxu0 0.0
  %528 = vmatmul.mubr.f32.gmra.mrb[0].mxu0 %v223
  %v529 = vpop.f32.mrb[0].mxu0
  %v530 = vadd.f32 0.0, %v529
  %v531 = vpop.f32.mrb[0].mxu0
  %532 = vmatprep.mubr.f32.mxu0 0.0
  %533 = vmatmul.mubr.f32.gmra.mrb[0].mxu0 %v226
  %v534 = vpop.f32.mrb[0].mxu0
  %v535 = vadd.f32 0.0, %v534
  %v536 = vpop.f32.mrb[0].mxu0
  %537 = vdwg.mxu0
  %v538 = vld [vmem:[%s2] sm:$0x1]
  %v539 = vld [vmem:[%s3] sm:$0x1]
  %vm540 = vcmask 261120
  %v541 = vsel %vm540, %v295, 0.0
  %v542 = vsel %vm540, %v300, 0.0
  %v543 = vadd.f32 %v541, %v542
  %v544 = vsel %vm540, %v305, 0.0
  %v545 = vadd.f32 %v543, %v544
  %v546 = vsel %vm540, %v310, 0.0
  %v547 = vadd.f32 %v545, %v546
  %v548 = vsel %vm540, %v315, 0.0
  %v549 = vadd.f32 %v547, %v548
  %v550 = vsel %vm540, %v320, 0.0
  %v551 = vadd.f32 %v549, %v550
  %v552 = vsel %vm540, %v325, 0.0
  %v553 = vadd.f32 %v551, %v552
  %v554 = vsel %vm540, %v330, 0.0
  %v555 = vadd.f32 %v553, %v554
  %v556 = vsel %vm540, %v335, 0.0
  %v557 = vadd.f32 %v555, %v556
  %v558 = vsel %vm540, %v340, 0.0
  %v559 = vadd.f32 %v557, %v558
  %v560 = vsel %vm540, %v345, 0.0
  %v561 = vadd.f32 %v559, %v560
  %v562 = vsel %vm540, %v350, 0.0
  %v563 = vadd.f32 %v561, %v562
  %v564 = vsel %vm540, %v355, 0.0
  %v565 = vadd.f32 %v563, %v564
  %v566 = vsel %vm540, %v360, 0.0
  %v567 = vadd.f32 %v565, %v566
  %v568 = vsel %vm540, %v365, 0.0
  %v569 = vadd.f32 %v567, %v568
  %v570 = vsel %vm540, %v370, 0.0
  %v571 = vadd.f32 %v569, %v570
  %v572 = vsel %vm540, %v375, 0.0
  %v573 = vadd.f32 %v571, %v572
  %v574 = vsel %vm540, %v380, 0.0
  %v575 = vadd.f32 %v573, %v574
  %v576 = vsel %vm540, %v385, 0.0
  %v577 = vadd.f32 %v575, %v576
  %v578 = vsel %vm540, %v390, 0.0
  %v579 = vadd.f32 %v577, %v578
  %v580 = vsel %vm540, %v395, 0.0
  %v581 = vadd.f32 %v579, %v580
  %v582 = vsel %vm540, %v400, 0.0
  %v583 = vadd.f32 %v581, %v582
  %v584 = vsel %vm540, %v405, 0.0
  %v585 = vadd.f32 %v583, %v584
  %v586 = vsel %vm540, %v410, 0.0
  %v587 = vadd.f32 %v585, %v586
  %v588 = vsel %vm540, %v415, 0.0
  %v589 = vadd.f32 %v587, %v588
  %v590 = vsel %vm540, %v420, 0.0
  %v591 = vadd.f32 %v589, %v590
  %v592 = vsel %vm540, %v425, 0.0
  %v593 = vadd.f32 %v591, %v592
  %v594 = vsel %vm540, %v430, 0.0
  %v595 = vadd.f32 %v593, %v594
  %v596 = vsel %vm540, %v435, 0.0
  %v597 = vadd.f32 %v595, %v596
  %v598 = vsel %vm540, %v440, 0.0
  %v599 = vadd.f32 %v597, %v598
  %v600 = vsel %vm540, %v445, 0.0
  %v601 = vadd.f32 %v599, %v600
  %v602 = vsel %vm540, %v450, 0.0
  %v603 = vadd.f32 %v601, %v602
  %v604 = vsel %vm540, %v455, 0.0
  %v605 = vadd.f32 %v603, %v604
  %v606 = vsel %vm540, %v460, 0.0
  %v607 = vadd.f32 %v605, %v606
  %v608 = vsel %vm540, %v465, 0.0
  %v609 = vadd.f32 %v607, %v608
  %v610 = vsel %vm540, %v470, 0.0
  %v611 = vadd.f32 %v609, %v610
  %v612 = vsel %vm540, %v475, 0.0
  %v613 = vadd.f32 %v611, %v612
  %v614 = vsel %vm540, %v480, 0.0
  %v615 = vadd.f32 %v613, %v614
  %v616 = vsel %vm540, %v485, 0.0
  %v617 = vadd.f32 %v615, %v616
  %v618 = vsel %vm540, %v490, 0.0
  %v619 = vadd.f32 %v617, %v618
  %v620 = vsel %vm540, %v495, 0.0
  %v621 = vadd.f32 %v619, %v620
  %v622 = vsel %vm540, %v500, 0.0
  %v623 = vadd.f32 %v621, %v622
  %v624 = vsel %vm540, %v505, 0.0
  %v625 = vadd.f32 %v623, %v624
  %v626 = vsel %vm540, %v510, 0.0
  %v627 = vadd.f32 %v625, %v626
  %v628 = vsel %vm540, %v515, 0.0
  %v629 = vadd.f32 %v627, %v628
  %v630 = vsel %vm540, %v520, 0.0
  %v631 = vadd.f32 %v629, %v630
  %v632 = vsel %vm540, %v525, 0.0
  %v633 = vadd.f32 %v631, %v632
  %v634 = vsel %vm540, %v530, 0.0
  %v635 = vadd.f32 %v633, %v634
  %v636 = vsel %vm540, %v535, 0.0
  %v637 = vadd.f32 %v635, %v636
  %v638 = vrot.slane %v637, 4
  %v639 = vadd.f32 %v637, %v638
  %v640 = vrot.slane %v639, 2
  %v641 = vadd.f32 %v639, %v640
  %v642 = vrot.slane %v641, 1
  %v643 = vadd.f32 %v641, %v642
  %v644 = vmul.f32 %v295, %v295
  %v645 = vmul.f32 %v300, %v300
  %v646 = vmul.f32 %v305, %v305
  %v647 = vmul.f32 %v310, %v310
  %v648 = vmul.f32 %v315, %v315
  %v649 = vmul.f32 %v320, %v320
  %v650 = vmul.f32 %v325, %v325
  %v651 = vmul.f32 %v330, %v330
  %v652 = vmul.f32 %v335, %v335
  %v653 = vmul.f32 %v340, %v340
  %v654 = vmul.f32 %v345, %v345
  %v655 = vmul.f32 %v350, %v350
  %v656 = vmul.f32 %v355, %v355
  %v657 = vmul.f32 %v360, %v360
  %v658 = vmul.f32 %v365, %v365
  %v659 = vmul.f32 %v370, %v370
  %v660 = vmul.f32 %v375, %v375
  %v661 = vmul.f32 %v380, %v380
  %v662 = vmul.f32 %v385, %v385
  %v663 = vmul.f32 %v390, %v390
  %v664 = vmul.f32 %v395, %v395
  %v665 = vmul.f32 %v400, %v400
  %v666 = vmul.f32 %v405, %v405
  %v667 = vmul.f32 %v410, %v410
  %v668 = vmul.f32 %v415, %v415
  %v669 = vmul.f32 %v420, %v420
  %v670 = vmul.f32 %v425, %v425
  %v671 = vmul.f32 %v430, %v430
  %v672 = vmul.f32 %v435, %v435
  %v673 = vmul.f32 %v440, %v440
  %v674 = vmul.f32 %v445, %v445
  %v675 = vmul.f32 %v450, %v450
  %v676 = vmul.f32 %v455, %v455
  %v677 = vmul.f32 %v460, %v460
  %v678 = vmul.f32 %v465, %v465
  %v679 = vmul.f32 %v470, %v470
  %v680 = vmul.f32 %v475, %v475
  %v681 = vmul.f32 %v480, %v480
  %v682 = vmul.f32 %v485, %v485
  %v683 = vmul.f32 %v490, %v490
  %v684 = vmul.f32 %v495, %v495
  %v685 = vmul.f32 %v500, %v500
  %v686 = vmul.f32 %v505, %v505
  %v687 = vmul.f32 %v510, %v510
  %v688 = vmul.f32 %v515, %v515
  %v689 = vmul.f32 %v520, %v520
  %v690 = vmul.f32 %v525, %v525
  %v691 = vmul.f32 %v530, %v530
  %v692 = vmul.f32 %v535, %v535
  %v693 = vsel %vm540, %v644, 0.0
  %v694 = vsel %vm540, %v645, 0.0
  %v695 = vadd.f32 %v693, %v694
  %v696 = vsel %vm540, %v646, 0.0
  %v697 = vadd.f32 %v695, %v696
  %v698 = vsel %vm540, %v647, 0.0
  %v699 = vadd.f32 %v697, %v698
  %v700 = vsel %vm540, %v648, 0.0
  %v701 = vadd.f32 %v699, %v700
  %v702 = vsel %vm540, %v649, 0.0
  %v703 = vadd.f32 %v701, %v702
  %v704 = vsel %vm540, %v650, 0.0
  %v705 = vadd.f32 %v703, %v704
  %v706 = vsel %vm540, %v651, 0.0
  %v707 = vadd.f32 %v705, %v706
  %v708 = vsel %vm540, %v652, 0.0
  %v709 = vadd.f32 %v707, %v708
  %v710 = vsel %vm540, %v653, 0.0
  %v711 = vadd.f32 %v709, %v710
  %v712 = vsel %vm540, %v654, 0.0
  %v713 = vadd.f32 %v711, %v712
  %v714 = vsel %vm540, %v655, 0.0
  %v715 = vadd.f32 %v713, %v714
  %v716 = vsel %vm540, %v656, 0.0
  %v717 = vadd.f32 %v715, %v716
  %v718 = vsel %vm540, %v657, 0.0
  %v719 = vadd.f32 %v717, %v718
  %v720 = vsel %vm540, %v658, 0.0
  %v721 = vadd.f32 %v719, %v720
  %v722 = vsel %vm540, %v659, 0.0
  %v723 = vadd.f32 %v721, %v722
  %v724 = vsel %vm540, %v660, 0.0
  %v725 = vadd.f32 %v723, %v724
  %v726 = vsel %vm540, %v661, 0.0
  %v727 = vadd.f32 %v725, %v726
  %v728 = vsel %vm540, %v662, 0.0
  %v729 = vadd.f32 %v727, %v728
  %v730 = vsel %vm540, %v663, 0.0
  %v731 = vadd.f32 %v729, %v730
  %v732 = vsel %vm540, %v664, 0.0
  %v733 = vadd.f32 %v731, %v732
  %v734 = vsel %vm540, %v665, 0.0
  %v735 = vadd.f32 %v733, %v734
  %v736 = vsel %vm540, %v666, 0.0
  %v737 = vadd.f32 %v735, %v736
  %v738 = vsel %vm540, %v667, 0.0
  %v739 = vadd.f32 %v737, %v738
  %v740 = vsel %vm540, %v668, 0.0
  %v741 = vadd.f32 %v739, %v740
  %v742 = vsel %vm540, %v669, 0.0
  %v743 = vadd.f32 %v741, %v742
  %v744 = vsel %vm540, %v670, 0.0
  %v745 = vadd.f32 %v743, %v744
  %v746 = vsel %vm540, %v671, 0.0
  %v747 = vadd.f32 %v745, %v746
  %v748 = vsel %vm540, %v672, 0.0
  %v749 = vadd.f32 %v747, %v748
  %v750 = vsel %vm540, %v673, 0.0
  %v751 = vadd.f32 %v749, %v750
  %v752 = vsel %vm540, %v674, 0.0
  %v753 = vadd.f32 %v751, %v752
  %v754 = vsel %vm540, %v675, 0.0
  %v755 = vadd.f32 %v753, %v754
  %v756 = vsel %vm540, %v676, 0.0
  %v757 = vadd.f32 %v755, %v756
  %v758 = vsel %vm540, %v677, 0.0
  %v759 = vadd.f32 %v757, %v758
  %v760 = vsel %vm540, %v678, 0.0
  %v761 = vadd.f32 %v759, %v760
  %v762 = vsel %vm540, %v679, 0.0
  %v763 = vadd.f32 %v761, %v762
  %v764 = vsel %vm540, %v680, 0.0
  %v765 = vadd.f32 %v763, %v764
  %v766 = vsel %vm540, %v681, 0.0
  %v767 = vadd.f32 %v765, %v766
  %v768 = vsel %vm540, %v682, 0.0
  %v769 = vadd.f32 %v767, %v768
  %v770 = vsel %vm540, %v683, 0.0
  %v771 = vadd.f32 %v769, %v770
  %v772 = vsel %vm540, %v684, 0.0
  %v773 = vadd.f32 %v771, %v772
  %v774 = vsel %vm540, %v685, 0.0
  %v775 = vadd.f32 %v773, %v774
  %v776 = vsel %vm540, %v686, 0.0
  %v777 = vadd.f32 %v775, %v776
  %v778 = vsel %vm540, %v687, 0.0
  %v779 = vadd.f32 %v777, %v778
  %v780 = vsel %vm540, %v688, 0.0
  %v781 = vadd.f32 %v779, %v780
  %v782 = vsel %vm540, %v689, 0.0
  %v783 = vadd.f32 %v781, %v782
  %v784 = vsel %vm540, %v690, 0.0
  %v785 = vadd.f32 %v783, %v784
  %v786 = vsel %vm540, %v691, 0.0
  %v787 = vadd.f32 %v785, %v786
  %v788 = vsel %vm540, %v692, 0.0
  %v789 = vadd.f32 %v787, %v788
  %v790 = vrot.slane %v789, 4
  %v791 = vadd.f32 %v789, %v790
  %v792 = vrot.slane %v791, 2
  %v793 = vadd.f32 %v791, %v792
  %v794 = vrot.slane %v793, 1
  %v795 = vadd.f32 %v793, %v794
  %797 = vrot.lane.b32.xlu0 %v643, 120
  %v798 = vpop.permute.xlu0 %797
  %v800 = vadd.f32 %v643, %v798
  %802 = vrot.lane.b32.xlu0 %v795, 120
  %v803 = vpop.permute.xlu0 %802
  %v805 = vadd.f32 %v795, %v803
  %806 = vrot.lane.b32.xlu0 %v643, 112
  %v807 = vpop.permute.xlu0 %806
  %v809 = vadd.f32 %v800, %v807
  %810 = vrot.lane.b32.xlu0 %v795, 112
  %v811 = vpop.permute.xlu0 %810
  %v813 = vadd.f32 %v805, %v811
  %814 = vrot.lane.b32.xlu0 %v643, 104
  %v815 = vpop.permute.xlu0 %814
  %v817 = vadd.f32 %v809, %v815
  %818 = vrot.lane.b32.xlu0 %v795, 104
  %v819 = vpop.permute.xlu0 %818
  %v821 = vadd.f32 %v813, %v819
  %v822 = vrcp.pop 1568.0
  %v823 = vmul.f32 %v817, %v822
  %v824 = vmul.f32 %v821, %v822
  %v825 = vmul.f32 %v823, %v823
  %v826 = vsub.f32 %v824, %v825
  %v827 = vmax.f32 %v826, 0.0
  %v828 = vadd.f32 %v827, 1e-05
  %v829 = vrsqrt.pop %v828
  %831 = vrot.lane.b32.xlu0 %v823, 8
  %v832 = vpop.permute.xlu0 %831
  %834 = vrot.lane.b32.xlu0 %v823, 16
  %v835 = vpop.permute.xlu0 %834
  %837 = vrot.lane.b32.xlu0 %v823, 24
  %v838 = vpop.permute.xlu0 %837
  %vm840 = vcmask 64512
  %v841 = vsel %vm840, %v823, %v832
  %vm842 = vcmask 130048
  %v843 = vsel %vm842, %v841, %v835
  %vm844 = vcmask 195584
  %v845 = vsel %vm844, %v843, %v838
  %847 = vrot.lane.b32.xlu0 %v829, 8
  %v848 = vpop.permute.xlu0 %847
  %850 = vrot.lane.b32.xlu0 %v829, 16
  %v851 = vpop.permute.xlu0 %850
  %853 = vrot.lane.b32.xlu0 %v829, 24
  %v854 = vpop.permute.xlu0 %853
  %v856 = vsel %vm840, %v829, %v848
  %v857 = vsel %vm842, %v856, %v851
  %v858 = vsel %vm844, %v857, %v854
  %v859 = vlaneseq
  %v860 = vshrl.u32 %v859, 7
  %v861 = vsub.s32 0, %v860
  %v862 = vrot.slane %v845, %v861
  %v863 = vsub.f32 %v295, %v862
  %v864 = vsub.f32 %v300, %v862
  %v865 = vsub.f32 %v305, %v862
  %v866 = vsub.f32 %v310, %v862
  %v867 = vsub.f32 %v315, %v862
  %v868 = vsub.f32 %v320, %v862
  %v869 = vsub.f32 %v325, %v862
  %v870 = vsub.f32 %v330, %v862
  %v871 = vsub.f32 %v335, %v862
  %v872 = vsub.f32 %v340, %v862
  %v873 = vsub.f32 %v345, %v862
  %v874 = vsub.f32 %v350, %v862
  %v875 = vsub.f32 %v355, %v862
  %v876 = vsub.f32 %v360, %v862
  %v877 = vsub.f32 %v365, %v862
  %v878 = vsub.f32 %v370, %v862
  %v879 = vsub.f32 %v375, %v862
  %v880 = vsub.f32 %v380, %v862
  %v881 = vsub.f32 %v385, %v862
  %v882 = vsub.f32 %v390, %v862
  %v883 = vsub.f32 %v395, %v862
  %v884 = vsub.f32 %v400, %v862
  %v885 = vsub.f32 %v405, %v862
  %v886 = vsub.f32 %v410, %v862
  %v887 = vsub.f32 %v415, %v862
  %v888 = vsub.f32 %v420, %v862
  %v889 = vsub.f32 %v425, %v862
  %v890 = vsub.f32 %v430, %v862
  %v891 = vsub.f32 %v435, %v862
  %v892 = vsub.f32 %v440, %v862
  %v893 = vsub.f32 %v445, %v862
  %v894 = vsub.f32 %v450, %v862
  %v895 = vsub.f32 %v455, %v862
  %v896 = vsub.f32 %v460, %v862
  %v897 = vsub.f32 %v465, %v862
  %v898 = vsub.f32 %v470, %v862
  %v899 = vsub.f32 %v475, %v862
  %v900 = vsub.f32 %v480, %v862
  %v901 = vsub.f32 %v485, %v862
  %v902 = vsub.f32 %v490, %v862
  %v903 = vsub.f32 %v495, %v862
  %v904 = vsub.f32 %v500, %v862
  %v905 = vsub.f32 %v505, %v862
  %v906 = vsub.f32 %v510, %v862
  %v907 = vsub.f32 %v515, %v862
  %v908 = vsub.f32 %v520, %v862
  %v909 = vsub.f32 %v525, %v862
  %v910 = vsub.f32 %v530, %v862
  %v911 = vsub.f32 %v535, %v862
  %v912 = vlaneseq
  %v913 = vshrl.u32 %v912, 7
  %v914 = vsub.s32 0, %v913
  %v915 = vrot.slane %v858, %v914
  %v916 = vmul.f32 %v863, %v915
  %v917 = vmul.f32 %v864, %v915
  %v918 = vmul.f32 %v865, %v915
  %v919 = vmul.f32 %v866, %v915
  %v920 = vmul.f32 %v867, %v915
  %v921 = vmul.f32 %v868, %v915
  %v922 = vmul.f32 %v869, %v915
  %v923 = vmul.f32 %v870, %v915
  %v924 = vmul.f32 %v871, %v915
  %v925 = vmul.f32 %v872, %v915
  %v926 = vmul.f32 %v873, %v915
  %v927 = vmul.f32 %v874, %v915
  %v928 = vmul.f32 %v875, %v915
  %v929 = vmul.f32 %v876, %v915
  %v930 = vmul.f32 %v877, %v915
  %v931 = vmul.f32 %v878, %v915
  %v932 = vmul.f32 %v879, %v915
  %v933 = vmul.f32 %v880, %v915
  %v934 = vmul.f32 %v881, %v915
  %v935 = vmul.f32 %v882, %v915
  %v936 = vmul.f32 %v883, %v915
  %v937 = vmul.f32 %v884, %v915
  %v938 = vmul.f32 %v885, %v915
  %v939 = vmul.f32 %v886, %v915
  %v940 = vmul.f32 %v887, %v915
  %v941 = vmul.f32 %v888, %v915
  %v942 = vmul.f32 %v889, %v915
  %v943 = vmul.f32 %v890, %v915
  %v944 = vmul.f32 %v891, %v915
  %v945 = vmul.f32 %v892, %v915
  %v946 = vmul.f32 %v893, %v915
  %v947 = vmul.f32 %v894, %v915
  %v948 = vmul.f32 %v895, %v915
  %v949 = vmul.f32 %v896, %v915
  %v950 = vmul.f32 %v897, %v915
  %v951 = vmul.f32 %v898, %v915
  %v952 = vmul.f32 %v899, %v915
  %v953 = vmul.f32 %v900, %v915
  %v954 = vmul.f32 %v901, %v915
  %v955 = vmul.f32 %v902, %v915
  %v956 = vmul.f32 %v903, %v915
  %v957 = vmul.f32 %v904, %v915
  %v958 = vmul.f32 %v905, %v915
  %v959 = vmul.f32 %v906, %v915
  %v960 = vmul.f32 %v907, %v915
  %v961 = vmul.f32 %v908, %v915
  %v962 = vmul.f32 %v909, %v915
  %v963 = vmul.f32 %v910, %v915
  %v964 = vmul.f32 %v911, %v915
  %v966 = vlaneseq
  %v967 = vshrl.u32 %v966, 7
  %v968 = vsub.s32 0, %v967
  %v969 = vrot.slane %v538, %v968
  %v971 = vmul.f32 %v916, %v969
  %v972 = vmul.f32 %v917, %v969
  %v973 = vmul.f32 %v918, %v969
  %v974 = vmul.f32 %v919, %v969
  %v975 = vmul.f32 %v920, %v969
  %v976 = vmul.f32 %v921, %v969
  %v977 = vmul.f32 %v922, %v969
  %v978 = vmul.f32 %v923, %v969
  %v979 = vmul.f32 %v924, %v969
  %v980 = vmul.f32 %v925, %v969
  %v981 = vmul.f32 %v926, %v969
  %v982 = vmul.f32 %v927, %v969
  %v983 = vmul.f32 %v928, %v969
  %v984 = vmul.f32 %v929, %v969
  %v985 = vmul.f32 %v930, %v969
  %v986 = vmul.f32 %v931, %v969
  %v987 = vmul.f32 %v932, %v969
  %v988 = vmul.f32 %v933, %v969
  %v989 = vmul.f32 %v934, %v969
  %v990 = vmul.f32 %v935, %v969
  %v991 = vmul.f32 %v936, %v969
  %v992 = vmul.f32 %v937, %v969
  %v993 = vmul.f32 %v938, %v969
  %v994 = vmul.f32 %v939, %v969
  %v995 = vmul.f32 %v940, %v969
  %v996 = vmul.f32 %v941, %v969
  %v997 = vmul.f32 %v942, %v969
  %v998 = vmul.f32 %v943, %v969
  %v999 = vmul.f32 %v944, %v969
  %v1000 = vmul.f32 %v945, %v969
  %v1001 = vmul.f32 %v946, %v969
  %v1002 = vmul.f32 %v947, %v969
  %v1003 = vmul.f32 %v948, %v969
  %v1004 = vmul.f32 %v949, %v969
  %v1005 = vmul.f32 %v950, %v969
  %v1006 = vmul.f32 %v951, %v969
  %v1007 = vmul.f32 %v952, %v969
  %v1008 = vmul.f32 %v953, %v969
  %v1009 = vmul.f32 %v954, %v969
  %v1010 = vmul.f32 %v955, %v969
  %v1011 = vmul.f32 %v956, %v969
  %v1012 = vmul.f32 %v957, %v969
  %v1013 = vmul.f32 %v958, %v969
  %v1014 = vmul.f32 %v959, %v969
  %v1015 = vmul.f32 %v960, %v969
  %v1016 = vmul.f32 %v961, %v969
  %v1017 = vmul.f32 %v962, %v969
  %v1018 = vmul.f32 %v963, %v969
  %v1019 = vmul.f32 %v964, %v969
  %v1021 = vlaneseq
  %v1022 = vshrl.u32 %v1021, 7
  %v1023 = vsub.s32 0, %v1022
  %v1024 = vrot.slane %v539, %v1023
  %v1026 = vadd.f32 %v971, %v1024
  %v1027 = vadd.f32 %v972, %v1024
  %v1028 = vadd.f32 %v973, %v1024
  %v1029 = vadd.f32 %v974, %v1024
  %v1030 = vadd.f32 %v975, %v1024
  %v1031 = vadd.f32 %v976, %v1024
  %v1032 = vadd.f32 %v977, %v1024
  %v1033 = vadd.f32 %v978, %v1024
  %v1034 = vadd.f32 %v979, %v1024
  %v1035 = vadd.f32 %v980, %v1024
  %v1036 = vadd.f32 %v981, %v1024
  %v1037 = vadd.f32 %v982, %v1024
  %v1038 = vadd.f32 %v983, %v1024
  %v1039 = vadd.f32 %v984, %v1024
  %v1040 = vadd.f32 %v985, %v1024
  %v1041 = vadd.f32 %v986, %v1024
  %v1042 = vadd.f32 %v987, %v1024
  %v1043 = vadd.f32 %v988, %v1024
  %v1044 = vadd.f32 %v989, %v1024
  %v1045 = vadd.f32 %v990, %v1024
  %v1046 = vadd.f32 %v991, %v1024
  %v1047 = vadd.f32 %v992, %v1024
  %v1048 = vadd.f32 %v993, %v1024
  %v1049 = vadd.f32 %v994, %v1024
  %v1050 = vadd.f32 %v995, %v1024
  %v1051 = vadd.f32 %v996, %v1024
  %v1052 = vadd.f32 %v997, %v1024
  %v1053 = vadd.f32 %v998, %v1024
  %v1054 = vadd.f32 %v999, %v1024
  %v1055 = vadd.f32 %v1000, %v1024
  %v1056 = vadd.f32 %v1001, %v1024
  %v1057 = vadd.f32 %v1002, %v1024
  %v1058 = vadd.f32 %v1003, %v1024
  %v1059 = vadd.f32 %v1004, %v1024
  %v1060 = vadd.f32 %v1005, %v1024
  %v1061 = vadd.f32 %v1006, %v1024
  %v1062 = vadd.f32 %v1007, %v1024
  %v1063 = vadd.f32 %v1008, %v1024
  %v1064 = vadd.f32 %v1009, %v1024
  %v1065 = vadd.f32 %v1010, %v1024
  %v1066 = vadd.f32 %v1011, %v1024
  %v1067 = vadd.f32 %v1012, %v1024
  %v1068 = vadd.f32 %v1013, %v1024
  %v1069 = vadd.f32 %v1014, %v1024
  %v1070 = vadd.f32 %v1015, %v1024
  %v1071 = vadd.f32 %v1016, %v1024
  %v1072 = vadd.f32 %v1017, %v1024
  %v1073 = vadd.f32 %v1018, %v1024
  %v1074 = vadd.f32 %v1019, %v1024
  %v1075 = vmax.f32 %v1026, 0.0
  %v1076 = vmax.f32 %v1027, 0.0
  %v1077 = vmax.f32 %v1028, 0.0
  %v1078 = vmax.f32 %v1029, 0.0
  %v1079 = vmax.f32 %v1030, 0.0
  %v1080 = vmax.f32 %v1031, 0.0
  %v1081 = vmax.f32 %v1032, 0.0
  %v1082 = vmax.f32 %v1033, 0.0
  %v1083 = vmax.f32 %v1034, 0.0
  %v1084 = vmax.f32 %v1035, 0.0
  %v1085 = vmax.f32 %v1036, 0.0
  %v1086 = vmax.f32 %v1037, 0.0
  %v1087 = vmax.f32 %v1038, 0.0
  %v1088 = vmax.f32 %v1039, 0.0
  %v1089 = vmax.f32 %v1040, 0.0
  %v1090 = vmax.f32 %v1041, 0.0
  %v1091 = vmax.f32 %v1042, 0.0
  %v1092 = vmax.f32 %v1043, 0.0
  %v1093 = vmax.f32 %v1044, 0.0
  %v1094 = vmax.f32 %v1045, 0.0
  %v1095 = vmax.f32 %v1046, 0.0
  %v1096 = vmax.f32 %v1047, 0.0
  %v1097 = vmax.f32 %v1048, 0.0
  %v1098 = vmax.f32 %v1049, 0.0
  %v1099 = vmax.f32 %v1050, 0.0
  %v1100 = vmax.f32 %v1051, 0.0
  %v1101 = vmax.f32 %v1052, 0.0
  %v1102 = vmax.f32 %v1053, 0.0
  %v1103 = vmax.f32 %v1054, 0.0
  %v1104 = vmax.f32 %v1055, 0.0
  %v1105 = vmax.f32 %v1056, 0.0
  %v1106 = vmax.f32 %v1057, 0.0
  %v1107 = vmax.f32 %v1058, 0.0
  %v1108 = vmax.f32 %v1059, 0.0
  %v1109 = vmax.f32 %v1060, 0.0
  %v1110 = vmax.f32 %v1061, 0.0
  %v1111 = vmax.f32 %v1062, 0.0
  %v1112 = vmax.f32 %v1063, 0.0
  %v1113 = vmax.f32 %v1064, 0.0
  %v1114 = vmax.f32 %v1065, 0.0
  %v1115 = vmax.f32 %v1066, 0.0
  %v1116 = vmax.f32 %v1067, 0.0
  %v1117 = vmax.f32 %v1068, 0.0
  %v1118 = vmax.f32 %v1069, 0.0
  %v1119 = vmax.f32 %v1070, 0.0
  %v1120 = vmax.f32 %v1071, 0.0
  %v1121 = vmax.f32 %v1072, 0.0
  %v1122 = vmax.f32 %v1073, 0.0
  %v1123 = vmax.f32 %v1074, 0.0
  %v1124 = vld [vmem:[%s4] sm:$0xff]
  %v1125 = vld [vmem:[%s4 + $0x8] sm:$0xff]
  %v1126 = vld [vmem:[%s4 + $0x10] sm:$0xff]
  %v1127 = vld [vmem:[%s4 + $0x18] sm:$0xff]
  %v1128 = vld [vmem:[%s5] sm:$0x1]
  %v1130 = vlaneseq
  %v1131 = vshrl.u32 %v1130, 7
  %v1132 = vsub.s32 0, %v1131
  %v1133 = vrot.slane %v1128, %v1132
  %v1136 = vsel %vm540, %v1075, 0
  %v1139 = vsel %vm540, %v1076, 0
  %v1142 = vsel %vm540, %v1077, 0
  %v1145 = vsel %vm540, %v1078, 0
  %v1148 = vsel %vm540, %v1079, 0
  %v1151 = vsel %vm540, %v1080, 0
  %v1154 = vsel %vm540, %v1081, 0
  %v1157 = vsel %vm540, %v1082, 0
  %v1160 = vsel %vm540, %v1083, 0
  %v1163 = vsel %vm540, %v1084, 0
  %v1166 = vsel %vm540, %v1085, 0
  %v1169 = vsel %vm540, %v1086, 0
  %v1172 = vsel %vm540, %v1087, 0
  %v1175 = vsel %vm540, %v1088, 0
  %v1178 = vsel %vm540, %v1089, 0
  %v1181 = vsel %vm540, %v1090, 0
  %v1184 = vsel %vm540, %v1091, 0
  %v1187 = vsel %vm540, %v1092, 0
  %v1190 = vsel %vm540, %v1093, 0
  %v1193 = vsel %vm540, %v1094, 0
  %v1196 = vsel %vm540, %v1095, 0
  %v1199 = vsel %vm540, %v1096, 0
  %v1202 = vsel %vm540, %v1097, 0
  %v1205 = vsel %vm540, %v1098, 0
  %v1208 = vsel %vm540, %v1099, 0
  %v1211 = vsel %vm540, %v1100, 0
  %v1214 = vsel %vm540, %v1101, 0
  %v1217 = vsel %vm540, %v1102, 0
  %v1220 = vsel %vm540, %v1103, 0
  %v1223 = vsel %vm540, %v1104, 0
  %v1226 = vsel %vm540, %v1105, 0
  %v1229 = vsel %vm540, %v1106, 0
  %v1232 = vsel %vm540, %v1107, 0
  %v1235 = vsel %vm540, %v1108, 0
  %v1238 = vsel %vm540, %v1109, 0
  %v1241 = vsel %vm540, %v1110, 0
  %v1244 = vsel %vm540, %v1111, 0
  %v1247 = vsel %vm540, %v1112, 0
  %v1250 = vsel %vm540, %v1113, 0
  %v1253 = vsel %vm540, %v1114, 0
  %v1256 = vsel %vm540, %v1115, 0
  %v1259 = vsel %vm540, %v1116, 0
  %v1262 = vsel %vm540, %v1117, 0
  %v1265 = vsel %vm540, %v1118, 0
  %v1268 = vsel %vm540, %v1119, 0
  %v1271 = vsel %vm540, %v1120, 0
  %v1274 = vsel %vm540, %v1121, 0
  %v1277 = vsel %vm540, %v1122, 0
  %v1280 = vsel %vm540, %v1123, 0
  %1282 = vmatprep.subr.mxu0 0.0
  %1283 = vmatpush1.msra.mxu0 %v1124
  %1284 = vmatprep.subr.mxu0 0.0
  %1285 = vmatpush1.msra.mxu0 %v1125
  %1286 = vmatprep.subr.mxu0 0.0
  %1287 = vmatpush1.msra.mxu0 %v1126
  %1288 = vmatprep.subr.mxu0 0.0
  %1289 = vmatpush1.msra.mxu0 %v1127
  %1290 = vmatprep.subr.mxu0 0.0
  %1291 = vmatpush1.msra.mxu0 0.0
  %1292 = vmatprep.subr.mxu0 0.0
  %1293 = vmatpush1.msra.mxu0 0.0
  %1294 = vmatprep.subr.mxu0 0.0
  %1295 = vmatpush1.msra.mxu0 0.0
  %1296 = vmatprep.subr.mxu0 0.0
  %1297 = vmatpush1.msra.mxu0 0.0
  %1298 = vmatprep.subr.mxu0 0.0
  %1299 = vmatpush1.msra.mxu0 0.0
  %1300 = vmatprep.subr.mxu0 0.0
  %1301 = vmatpush1.msra.mxu0 0.0
  %1302 = vmatprep.subr.mxu0 0.0
  %1303 = vmatpush1.msra.mxu0 0.0
  %1304 = vmatprep.subr.mxu0 0.0
  %1305 = vmatpush1.msra.mxu0 0.0
  %1306 = vmatprep.subr.mxu0 0.0
  %1307 = vmatpush1.msra.mxu0 0.0
  %1308 = vmatprep.subr.mxu0 0.0
  %1309 = vmatpush1.msra.mxu0 0.0
  %1310 = vmatprep.subr.mxu0 0.0
  %1311 = vmatpush1.msra.mxu0 0.0
  %1312 = vmatprep.subr.mxu0 0.0
  %1313 = vmatpush1.msra.mxu0 0.0
  %1314 = vmatprep.subr.mxu0 0.0
  %1315 = vmatpush1.msra.mxu0 0.0
  %1316 = vmatprep.subr.mxu0 0.0
  %1317 = vmatpush1.msra.mxu0 0.0
  %1318 = vmatprep.subr.mxu0 0.0
  %1319 = vmatpush1.msra.mxu0 0.0
  %1320 = vmatprep.subr.mxu0 0.0
  %1321 = vmatpush1.msra.mxu0 0.0
  %1322 = vmatprep.subr.mxu0 0.0
  %1323 = vmatpush1.msra.mxu0 0.0
  %1324 = vmatprep.subr.mxu0 0.0
  %1325 = vmatpush1.msra.mxu0 0.0
  %1326 = vmatprep.subr.mxu0 0.0
  %1327 = vmatpush1.msra.mxu0 0.0
  %1328 = vmatprep.subr.mxu0 0.0
  %1329 = vmatpush1.msra.mxu0 0.0
  %1330 = vmatprep.subr.mxu0 0.0
  %1331 = vmatpush1.msra.mxu0 0.0
  %1332 = vmatprep.subr.mxu0 0.0
  %1333 = vmatpush1.msra.mxu0 0.0
  %1334 = vmatprep.subr.mxu0 0.0
  %1335 = vmatpush1.msra.mxu0 0.0
  %1336 = vmatprep.subr.mxu0 0.0
  %1337 = vmatpush1.msra.mxu0 0.0
  %1338 = vmatprep.subr.mxu0 0.0
  %1339 = vmatpush1.msra.mxu0 0.0
  %1340 = vmatprep.subr.mxu0 0.0
  %1341 = vmatpush1.msra.mxu0 0.0
  %1342 = vmatprep.subr.mxu0 0.0
  %1343 = vmatpush1.msra.mxu0 0.0
  %1344 = vmatprep.subr.mxu0 0.0
  %1345 = vmatpush1.msra.mxu0 0.0
  %1346 = vmatprep.mubr.f32.mxu0 0.0
  %1347 = vmatmul.mubr.f32.gmra.mrb[0].mxu0 %v1136
  %v1348 = vpop.f32.mrb[0].mxu0
  %v1349 = vadd.f32 %v1133, %v1348
  %v1350 = vpop.f32.mrb[0].mxu0
  %1351 = vmatprep.mubr.f32.mxu0 0.0
  %1352 = vmatmul.mubr.f32.gmra.mrb[0].mxu0 %v1139
  %v1353 = vpop.f32.mrb[0].mxu0
  %v1354 = vadd.f32 %v1133, %v1353
  %v1355 = vpop.f32.mrb[0].mxu0
  %1356 = vmatprep.mubr.f32.mxu0 0.0
  %1357 = vmatmul.mubr.f32.gmra.mrb[0].mxu0 %v1142
  %v1358 = vpop.f32.mrb[0].mxu0
  %v1359 = vadd.f32 %v1133, %v1358
  %v1360 = vpop.f32.mrb[0].mxu0
  %1361 = vmatprep.mubr.f32.mxu0 0.0
  %1362 = vmatmul.mubr.f32.gmra.mrb[0].mxu0 %v1145
  %v1363 = vpop.f32.mrb[0].mxu0
  %v1364 = vadd.f32 %v1133, %v1363
  %v1365 = vpop.f32.mrb[0].mxu0
  %1366 = vmatprep.mubr.f32.mxu0 0.0
  %1367 = vmatmul.mubr.f32.gmra.mrb[0].mxu0 %v1148
  %v1368 = vpop.f32.mrb[0].mxu0
  %v1369 = vadd.f32 %v1133, %v1368
  %v1370 = vpop.f32.mrb[0].mxu0
  %1371 = vmatprep.mubr.f32.mxu0 0.0
  %1372 = vmatmul.mubr.f32.gmra.mrb[0].mxu0 %v1151
  %v1373 = vpop.f32.mrb[0].mxu0
  %v1374 = vadd.f32 %v1133, %v1373
  %v1375 = vpop.f32.mrb[0].mxu0
  %1376 = vmatprep.mubr.f32.mxu0 0.0
  %1377 = vmatmul.mubr.f32.gmra.mrb[0].mxu0 %v1154
  %v1378 = vpop.f32.mrb[0].mxu0
  %v1379 = vadd.f32 %v1133, %v1378
  %v1380 = vpop.f32.mrb[0].mxu0
  %1381 = vmatprep.mubr.f32.mxu0 0.0
  %1382 = vmatmul.mubr.f32.gmra.mrb[0].mxu0 %v1157
  %v1383 = vpop.f32.mrb[0].mxu0
  %v1384 = vadd.f32 %v1133, %v1383
  %v1385 = vpop.f32.mrb[0].mxu0
  %1386 = vmatprep.mubr.f32.mxu0 0.0
  %1387 = vmatmul.mubr.f32.gmra.mrb[0].mxu0 %v1160
  %v1388 = vpop.f32.mrb[0].mxu0
  %v1389 = vadd.f32 %v1133, %v1388
  %v1390 = vpop.f32.mrb[0].mxu0
  %1391 = vmatprep.mubr.f32.mxu0 0.0
  %1392 = vmatmul.mubr.f32.gmra.mrb[0].mxu0 %v1163
  %v1393 = vpop.f32.mrb[0].mxu0
  %v1394 = vadd.f32 %v1133, %v1393
  %v1395 = vpop.f32.mrb[0].mxu0
  %1396 = vmatprep.mubr.f32.mxu0 0.0
  %1397 = vmatmul.mubr.f32.gmra.mrb[0].mxu0 %v1166
  %v1398 = vpop.f32.mrb[0].mxu0
  %v1399 = vadd.f32 %v1133, %v1398
  %v1400 = vpop.f32.mrb[0].mxu0
  %1401 = vmatprep.mubr.f32.mxu0 0.0
  %1402 = vmatmul.mubr.f32.gmra.mrb[0].mxu0 %v1169
  %v1403 = vpop.f32.mrb[0].mxu0
  %v1404 = vadd.f32 %v1133, %v1403
  %v1405 = vpop.f32.mrb[0].mxu0
  %1406 = vmatprep.mubr.f32.mxu0 0.0
  %1407 = vmatmul.mubr.f32.gmra.mrb[0].mxu0 %v1172
  %v1408 = vpop.f32.mrb[0].mxu0
  %v1409 = vadd.f32 %v1133, %v1408
  %v1410 = vpop.f32.mrb[0].mxu0
  %1411 = vmatprep.mubr.f32.mxu0 0.0
  %1412 = vmatmul.mubr.f32.gmra.mrb[0].mxu0 %v1175
  %v1413 = vpop.f32.mrb[0].mxu0
  %v1414 = vadd.f32 %v1133, %v1413
  %v1415 = vpop.f32.mrb[0].mxu0
  %1416 = vmatprep.mubr.f32.mxu0 0.0
  %1417 = vmatmul.mubr.f32.gmra.mrb[0].mxu0 %v1178
  %v1418 = vpop.f32.mrb[0].mxu0
  %v1419 = vadd.f32 %v1133, %v1418
  %v1420 = vpop.f32.mrb[0].mxu0
  %1421 = vmatprep.mubr.f32.mxu0 0.0
  %1422 = vmatmul.mubr.f32.gmra.mrb[0].mxu0 %v1181
  %v1423 = vpop.f32.mrb[0].mxu0
  %v1424 = vadd.f32 %v1133, %v1423
  %v1425 = vpop.f32.mrb[0].mxu0
  %1426 = vmatprep.mubr.f32.mxu0 0.0
  %1427 = vmatmul.mubr.f32.gmra.mrb[0].mxu0 %v1184
  %v1428 = vpop.f32.mrb[0].mxu0
  %v1429 = vadd.f32 %v1133, %v1428
  %v1430 = vpop.f32.mrb[0].mxu0
  %1431 = vmatprep.mubr.f32.mxu0 0.0
  %1432 = vmatmul.mubr.f32.gmra.mrb[0].mxu0 %v1187
  %v1433 = vpop.f32.mrb[0].mxu0
  %v1434 = vadd.f32 %v1133, %v1433
  %v1435 = vpop.f32.mrb[0].mxu0
  %1436 = vmatprep.mubr.f32.mxu0 0.0
  %1437 = vmatmul.mubr.f32.gmra.mrb[0].mxu0 %v1190
  %v1438 = vpop.f32.mrb[0].mxu0
  %v1439 = vadd.f32 %v1133, %v1438
  %v1440 = vpop.f32.mrb[0].mxu0
  %1441 = vmatprep.mubr.f32.mxu0 0.0
  %1442 = vmatmul.mubr.f32.gmra.mrb[0].mxu0 %v1193
  %v1443 = vpop.f32.mrb[0].mxu0
  %v1444 = vadd.f32 %v1133, %v1443
  %v1445 = vpop.f32.mrb[0].mxu0
  %1446 = vmatprep.mubr.f32.mxu0 0.0
  %1447 = vmatmul.mubr.f32.gmra.mrb[0].mxu0 %v1196
  %v1448 = vpop.f32.mrb[0].mxu0
  %v1449 = vadd.f32 %v1133, %v1448
  %v1450 = vpop.f32.mrb[0].mxu0
  %1451 = vmatprep.mubr.f32.mxu0 0.0
  %1452 = vmatmul.mubr.f32.gmra.mrb[0].mxu0 %v1199
  %v1453 = vpop.f32.mrb[0].mxu0
  %v1454 = vadd.f32 %v1133, %v1453
  %v1455 = vpop.f32.mrb[0].mxu0
  %1456 = vmatprep.mubr.f32.mxu0 0.0
  %1457 = vmatmul.mubr.f32.gmra.mrb[0].mxu0 %v1202
  %v1458 = vpop.f32.mrb[0].mxu0
  %v1459 = vadd.f32 %v1133, %v1458
  %v1460 = vpop.f32.mrb[0].mxu0
  %1461 = vmatprep.mubr.f32.mxu0 0.0
  %1462 = vmatmul.mubr.f32.gmra.mrb[0].mxu0 %v1205
  %v1463 = vpop.f32.mrb[0].mxu0
  %v1464 = vadd.f32 %v1133, %v1463
  %v1465 = vpop.f32.mrb[0].mxu0
  %1466 = vmatprep.mubr.f32.mxu0 0.0
  %1467 = vmatmul.mubr.f32.gmra.mrb[0].mxu0 %v1208
  %v1468 = vpop.f32.mrb[0].mxu0
  %v1469 = vadd.f32 %v1133, %v1468
  %v1470 = vpop.f32.mrb[0].mxu0
  %1471 = vmatprep.mubr.f32.mxu0 0.0
  %1472 = vmatmul.mubr.f32.gmra.mrb[0].mxu0 %v1211
  %v1473 = vpop.f32.mrb[0].mxu0
  %v1474 = vadd.f32 %v1133, %v1473
  %v1475 = vpop.f32.mrb[0].mxu0
  %1476 = vmatprep.mubr.f32.mxu0 0.0
  %1477 = vmatmul.mubr.f32.gmra.mrb[0].mxu0 %v1214
  %v1478 = vpop.f32.mrb[0].mxu0
  %v1479 = vadd.f32 %v1133, %v1478
  %v1480 = vpop.f32.mrb[0].mxu0
  %1481 = vmatprep.mubr.f32.mxu0 0.0
  %1482 = vmatmul.mubr.f32.gmra.mrb[0].mxu0 %v1217
  %v1483 = vpop.f32.mrb[0].mxu0
  %v1484 = vadd.f32 %v1133, %v1483
  %v1485 = vpop.f32.mrb[0].mxu0
  %1486 = vmatprep.mubr.f32.mxu0 0.0
  %1487 = vmatmul.mubr.f32.gmra.mrb[0].mxu0 %v1220
  %v1488 = vpop.f32.mrb[0].mxu0
  %v1489 = vadd.f32 %v1133, %v1488
  %v1490 = vpop.f32.mrb[0].mxu0
  %1491 = vmatprep.mubr.f32.mxu0 0.0
  %1492 = vmatmul.mubr.f32.gmra.mrb[0].mxu0 %v1223
  %v1493 = vpop.f32.mrb[0].mxu0
  %v1494 = vadd.f32 %v1133, %v1493
  %v1495 = vpop.f32.mrb[0].mxu0
  %1496 = vmatprep.mubr.f32.mxu0 0.0
  %1497 = vmatmul.mubr.f32.gmra.mrb[0].mxu0 %v1226
  %v1498 = vpop.f32.mrb[0].mxu0
  %v1499 = vadd.f32 %v1133, %v1498
  %v1500 = vpop.f32.mrb[0].mxu0
  %1501 = vmatprep.mubr.f32.mxu0 0.0
  %1502 = vmatmul.mubr.f32.gmra.mrb[0].mxu0 %v1229
  %v1503 = vpop.f32.mrb[0].mxu0
  %v1504 = vadd.f32 %v1133, %v1503
  %v1505 = vpop.f32.mrb[0].mxu0
  %1506 = vmatprep.mubr.f32.mxu0 0.0
  %1507 = vmatmul.mubr.f32.gmra.mrb[0].mxu0 %v1232
  %v1508 = vpop.f32.mrb[0].mxu0
  %v1509 = vadd.f32 %v1133, %v1508
  %v1510 = vpop.f32.mrb[0].mxu0
  %1511 = vmatprep.mubr.f32.mxu0 0.0
  %1512 = vmatmul.mubr.f32.gmra.mrb[0].mxu0 %v1235
  %v1513 = vpop.f32.mrb[0].mxu0
  %v1514 = vadd.f32 %v1133, %v1513
  %v1515 = vpop.f32.mrb[0].mxu0
  %1516 = vmatprep.mubr.f32.mxu0 0.0
  %1517 = vmatmul.mubr.f32.gmra.mrb[0].mxu0 %v1238
  %v1518 = vpop.f32.mrb[0].mxu0
  %v1519 = vadd.f32 %v1133, %v1518
  %v1520 = vpop.f32.mrb[0].mxu0
  %1521 = vmatprep.mubr.f32.mxu0 0.0
  %1522 = vmatmul.mubr.f32.gmra.mrb[0].mxu0 %v1241
  %v1523 = vpop.f32.mrb[0].mxu0
  %v1524 = vadd.f32 %v1133, %v1523
  %v1525 = vpop.f32.mrb[0].mxu0
  %1526 = vmatprep.mubr.f32.mxu0 0.0
  %1527 = vmatmul.mubr.f32.gmra.mrb[0].mxu0 %v1244
  %v1528 = vpop.f32.mrb[0].mxu0
  %v1529 = vadd.f32 %v1133, %v1528
  %v1530 = vpop.f32.mrb[0].mxu0
  %1531 = vmatprep.mubr.f32.mxu0 0.0
  %1532 = vmatmul.mubr.f32.gmra.mrb[0].mxu0 %v1247
  %v1533 = vpop.f32.mrb[0].mxu0
  %v1534 = vadd.f32 %v1133, %v1533
  %v1535 = vpop.f32.mrb[0].mxu0
  %1536 = vmatprep.mubr.f32.mxu0 0.0
  %1537 = vmatmul.mubr.f32.gmra.mrb[0].mxu0 %v1250
  %v1538 = vpop.f32.mrb[0].mxu0
  %v1539 = vadd.f32 %v1133, %v1538
  %v1540 = vpop.f32.mrb[0].mxu0
  %1541 = vmatprep.mubr.f32.mxu0 0.0
  %1542 = vmatmul.mubr.f32.gmra.mrb[0].mxu0 %v1253
  %v1543 = vpop.f32.mrb[0].mxu0
  %v1544 = vadd.f32 %v1133, %v1543
  %v1545 = vpop.f32.mrb[0].mxu0
  %1546 = vmatprep.mubr.f32.mxu0 0.0
  %1547 = vmatmul.mubr.f32.gmra.mrb[0].mxu0 %v1256
  %v1548 = vpop.f32.mrb[0].mxu0
  %v1549 = vadd.f32 %v1133, %v1548
  %v1550 = vpop.f32.mrb[0].mxu0
  %1551 = vmatprep.mubr.f32.mxu0 0.0
  %1552 = vmatmul.mubr.f32.gmra.mrb[0].mxu0 %v1259
  %v1553 = vpop.f32.mrb[0].mxu0
  %v1554 = vadd.f32 %v1133, %v1553
  %v1555 = vpop.f32.mrb[0].mxu0
  %1556 = vmatprep.mubr.f32.mxu0 0.0
  %1557 = vmatmul.mubr.f32.gmra.mrb[0].mxu0 %v1262
  %v1558 = vpop.f32.mrb[0].mxu0
  %v1559 = vadd.f32 %v1133, %v1558
  %v1560 = vpop.f32.mrb[0].mxu0
  %1561 = vmatprep.mubr.f32.mxu0 0.0
  %1562 = vmatmul.mubr.f32.gmra.mrb[0].mxu0 %v1265
  %v1563 = vpop.f32.mrb[0].mxu0
  %v1564 = vadd.f32 %v1133, %v1563
  %v1565 = vpop.f32.mrb[0].mxu0
  %1566 = vmatprep.mubr.f32.mxu0 0.0
  %1567 = vmatmul.mubr.f32.gmra.mrb[0].mxu0 %v1268
  %v1568 = vpop.f32.mrb[0].mxu0
  %v1569 = vadd.f32 %v1133, %v1568
  %v1570 = vpop.f32.mrb[0].mxu0
  %1571 = vmatprep.mubr.f32.mxu0 0.0
  %1572 = vmatmul.mubr.f32.gmra.mrb[0].mxu0 %v1271
  %v1573 = vpop.f32.mrb[0].mxu0
  %v1574 = vadd.f32 %v1133, %v1573
  %v1575 = vpop.f32.mrb[0].mxu0
  %1576 = vmatprep.mubr.f32.mxu0 0.0
  %1577 = vmatmul.mubr.f32.gmra.mrb[0].mxu0 %v1274
  %v1578 = vpop.f32.mrb[0].mxu0
  %v1579 = vadd.f32 %v1133, %v1578
  %v1580 = vpop.f32.mrb[0].mxu0
  %1581 = vmatprep.mubr.f32.mxu0 0.0
  %1582 = vmatmul.mubr.f32.gmra.mrb[0].mxu0 %v1277
  %v1583 = vpop.f32.mrb[0].mxu0
  %v1584 = vadd.f32 %v1133, %v1583
  %v1585 = vpop.f32.mrb[0].mxu0
  %1586 = vmatprep.mubr.f32.mxu0 0.0
  %1587 = vmatmul.mubr.f32.gmra.mrb[0].mxu0 %v1280
  %v1588 = vpop.f32.mrb[0].mxu0
  %v1589 = vadd.f32 %v1133, %v1588
  %v1590 = vpop.f32.mrb[0].mxu0
  %1591 = vdwg.mxu0
  %vm1592 = vcmask 31744
  %1593 = vst.msk [vmem:[%s6] sm:$0xff] %vm1592, %v1349
  %1594 = vst.msk [vmem:[%s6 + $0x8] sm:$0xff] %vm1592, %v1354
  %1595 = vst.msk [vmem:[%s6 + $0x10] sm:$0xff] %vm1592, %v1359
  %1596 = vst.msk [vmem:[%s6 + $0x18] sm:$0xff] %vm1592, %v1364
  %1597 = vst.msk [vmem:[%s6 + $0x20] sm:$0xff] %vm1592, %v1369
  %1598 = vst.msk [vmem:[%s6 + $0x28] sm:$0xff] %vm1592, %v1374
  %1599 = vst.msk [vmem:[%s6 + $0x30] sm:$0xff] %vm1592, %v1379
  %1600 = vst.msk [vmem:[%s6 + $0x38] sm:$0xff] %vm1592, %v1384
  %1601 = vst.msk [vmem:[%s6 + $0x40] sm:$0xff] %vm1592, %v1389
  %1602 = vst.msk [vmem:[%s6 + $0x48] sm:$0xff] %vm1592, %v1394
  %1603 = vst.msk [vmem:[%s6 + $0x50] sm:$0xff] %vm1592, %v1399
  %1604 = vst.msk [vmem:[%s6 + $0x58] sm:$0xff] %vm1592, %v1404
  %1605 = vst.msk [vmem:[%s6 + $0x60] sm:$0xff] %vm1592, %v1409
  %1606 = vst.msk [vmem:[%s6 + $0x68] sm:$0xff] %vm1592, %v1414
  %1607 = vst.msk [vmem:[%s6 + $0x70] sm:$0xff] %vm1592, %v1419
  %1608 = vst.msk [vmem:[%s6 + $0x78] sm:$0xff] %vm1592, %v1424
  %1609 = vst.msk [vmem:[%s6 + $0x80] sm:$0xff] %vm1592, %v1429
  %1610 = vst.msk [vmem:[%s6 + $0x88] sm:$0xff] %vm1592, %v1434
  %1611 = vst.msk [vmem:[%s6 + $0x90] sm:$0xff] %vm1592, %v1439
  %1612 = vst.msk [vmem:[%s6 + $0x98] sm:$0xff] %vm1592, %v1444
  %1613 = vst.msk [vmem:[%s6 + $0xa0] sm:$0xff] %vm1592, %v1449
  %1614 = vst.msk [vmem:[%s6 + $0xa8] sm:$0xff] %vm1592, %v1454
  %1615 = vst.msk [vmem:[%s6 + $0xb0] sm:$0xff] %vm1592, %v1459
  %1616 = vst.msk [vmem:[%s6 + $0xb8] sm:$0xff] %vm1592, %v1464
  %1617 = vst.msk [vmem:[%s6 + $0xc0] sm:$0xff] %vm1592, %v1469
  %1618 = vst.msk [vmem:[%s6 + $0xc8] sm:$0xff] %vm1592, %v1474
  %1619 = vst.msk [vmem:[%s6 + $0xd0] sm:$0xff] %vm1592, %v1479
  %1620 = vst.msk [vmem:[%s6 + $0xd8] sm:$0xff] %vm1592, %v1484
  %1621 = vst.msk [vmem:[%s6 + $0xe0] sm:$0xff] %vm1592, %v1489
  %1622 = vst.msk [vmem:[%s6 + $0xe8] sm:$0xff] %vm1592, %v1494
  %1623 = vst.msk [vmem:[%s6 + $0xf0] sm:$0xff] %vm1592, %v1499
  %1624 = vst.msk [vmem:[%s6 + $0xf8] sm:$0xff] %vm1592, %v1504
  %1625 = vst.msk [vmem:[%s6 + $0x100] sm:$0xff] %vm1592, %v1509
  %1626 = vst.msk [vmem:[%s6 + $0x108] sm:$0xff] %vm1592, %v1514
  %1627 = vst.msk [vmem:[%s6 + $0x110] sm:$0xff] %vm1592, %v1519
  %1628 = vst.msk [vmem:[%s6 + $0x118] sm:$0xff] %vm1592, %v1524
  %1629 = vst.msk [vmem:[%s6 + $0x120] sm:$0xff] %vm1592, %v1529
  %1630 = vst.msk [vmem:[%s6 + $0x128] sm:$0xff] %vm1592, %v1534
  %1631 = vst.msk [vmem:[%s6 + $0x130] sm:$0xff] %vm1592, %v1539
  %1632 = vst.msk [vmem:[%s6 + $0x138] sm:$0xff] %vm1592, %v1544
  %1633 = vst.msk [vmem:[%s6 + $0x140] sm:$0xff] %vm1592, %v1549
  %1634 = vst.msk [vmem:[%s6 + $0x148] sm:$0xff] %vm1592, %v1554
  %1635 = vst.msk [vmem:[%s6 + $0x150] sm:$0xff] %vm1592, %v1559
  %1636 = vst.msk [vmem:[%s6 + $0x158] sm:$0xff] %vm1592, %v1564
  %1637 = vst.msk [vmem:[%s6 + $0x160] sm:$0xff] %vm1592, %v1569
  %1638 = vst.msk [vmem:[%s6 + $0x168] sm:$0xff] %vm1592, %v1574
  %1639 = vst.msk [vmem:[%s6 + $0x170] sm:$0xff] %vm1592, %v1579
  %1640 = vst.msk [vmem:[%s6 + $0x178] sm:$0xff] %vm1592, %v1584
  %1641 = vst.msk [vmem:[%s6 + $0x180] sm:$0xff] %vm1592, %v1589
  // Predicated region
  $region26: #{decoder_forward.5} parent=0 // pred_check
    _
  $region27: #{decoder_forward.5} parent=0 // pred_check_branch
    %1643 = sbr.rel (0) target = $region29
  $region28: #{decoder_forward.5} parent=0 // pred_region
    _
  $region29: #{decoder_forward.5} parent=0 // pred_fallthru
    _
  // Predicated region
  $region30: #{decoder_forward.5} parent=0 // pred_check
    _
  $region31: #{decoder_forward.5} parent=0 // pred_check_branch
    %1645 = sbr.rel (0) target = $region33
  $region32: #{decoder_forward.5} parent=0 // pred_region
    _
  $region33: #{decoder_forward.5} parent=0 // pred_fallthru
    _

</llo_original>
